<compile_context>
chip_gen: v6e
topology: v6e:2x2x1
jax: 0.10.0
libtpu: 0.0.40
codegen_flags: <defaults>
</compile_context>

<pallas_src>
import functools

import jax
import jax.numpy as jnp
from jax.experimental import pallas as pl
from jax.experimental.pallas import tpu as pltpu


def _make_self_attn_kernel(C, C8, TJ):
    Cqkv = 2 * C8 + C
    tj_aligned = (TJ % 128 == 0)

    def kernel(gamma_ref, x_ref, w_ref, b_ref, out_ref, attn_ref,
               q_sc, k_sc, v_sc):
        j = pl.program_id(1)

        # ---- per-batch prologue: fused QKV projection (one MXU pass over x) ----
        @pl.when(j == 0)
        def _init():
            xb = x_ref[0].astype(jnp.bfloat16)                                  # (N, C)
            qkv = jnp.dot(xb, w_ref[...],
                          preferred_element_type=jnp.float32) + b_ref[...]      # (N, 2*C8+C)
            q_sc[...] = qkv[:, 0:C8].astype(q_sc.dtype)
            k_sc[...] = qkv[:, C8:2 * C8].astype(k_sc.dtype)
            v_sc[...] = qkv[:, 2 * C8:Cqkv].astype(v_sc.dtype)
            out_ref[...] = jnp.zeros_like(out_ref)

        jo = j * TJ
        if tj_aligned:
            jo = pl.multiple_of(jo, 128)
        q = q_sc[...]                                  # (N,  C8) bf16
        k = k_sc[pl.ds(jo, TJ), :]                     # (TJ, C8) bf16
        v = v_sc[pl.ds(jo, TJ), :]                     # (TJ, C ) bf16

        # energy[i, jt] = sum_o q[i, o] * k[jt, o]   (== bmm(proj_query, proj_key) tile)
        energy = jax.lax.dot_general(q, k, (((1,), (1,)), ((), ())),
                                     preferred_element_type=jnp.float32)        # (N, TJ)

        # torch nn.Softmax(dim=1): normalize over the ROW axis -> exact per column tile
        e_max = jnp.max(energy, axis=0, keepdims=True)
        p = jnp.exp(energy - e_max)
        denom = jnp.sum(p, axis=0, keepdims=True)
        attn = p * pl.reciprocal(denom, approx=True)                            # (N, TJ)
        attn_ref[0] = attn.astype(attn_ref.dtype)

        # out[i, c] += sum_jt attn[i, jt] * v[jt, c]  (== bmm(proj_value, attention^T))
        part = jnp.dot(attn.astype(jnp.bfloat16), v,
                       preferred_element_type=jnp.float32)                      # (N, C)
        out_ref[0] = out_ref[0] + part

        # ---- per-batch epilogue: gamma * out + x ----
        @pl.when(j == pl.num_programs(1) - 1)
        def _fin():
            out_ref[0] = gamma_ref[0] * out_ref[0] + x_ref[0].astype(jnp.float32)

    return kernel


def _vmem_capacity_bytes(default=64 * 1024 * 1024):
    try:
        info = pltpu.get_tpu_info()
        cap = getattr(info, "vmem_capacity_bytes", None)
        return int(cap) if cap else default
    except Exception:
        return default


def _pick_col_tile(N, C, attn_itemsize, vmem_cap):
    """Largest key/column tile TJ (multiple of 128 dividing N) that fits the VMEM budget."""
    if N % 128 != 0:
        return N                                   # tiny / ragged spatial sizes: one tile
    lane_pad = lambda d: -(-d // 128) * 128
    c8 = max(C // 8, 1)
    budget = vmem_cap // 2                         # headroom for regalloc / other buffers
    fixed = (2 * N * lane_pad(C) * 4 +             # x block (double-buffered, lane-padded)
             N * lane_pad(C) * 4 +                 # out f32 accumulator block
             N * (2 * lane_pad(c8) + lane_pad(C)) * 2)   # q/k/v bf16 scratches
    per_col = N * (2 * attn_itemsize + 16)         # attn out (x2 bufs) + f32 temporaries
    tj = ((budget - fixed) // per_col) // 128 * 128
    tj = min(max(tj, 128), N)
    while N % tj:
        tj -= 128
    return int(tj)


@functools.partial(jax.jit, static_argnames=("tj", "attn_dtype"))
def self_attn_pallas(x_nchw, wq, bq, wk, bk, wv, bv, gamma, *,
                     tj=None, attn_dtype=jnp.bfloat16):
    """x_nchw: (B, C, H, W); wq/wk: (C//8, C); wv: (C, C); biases 1-D; gamma: (1,)."""
    B, C, H, W = x_nchw.shape
    N = H * W
    C8 = wq.shape[0]
    Cqkv = 2 * C8 + C

    vmem_cap = _vmem_capacity_bytes()
    if tj is None:
        tj = _pick_col_tile(N, C, jnp.dtype(attn_dtype).itemsize, vmem_cap)
    assert N % tj == 0, (N, tj)

    # Channel-last per-batch view (N, C); the 1x1 convs become one fused matmul.
    x_nc = jnp.transpose(x_nchw.reshape(B, C, N), (0, 2, 1))                     # (B, N, C)
    w_fused = jnp.concatenate([wq.T, wk.T, wv.T], axis=1).astype(jnp.bfloat16)   # (C, Cqkv)
    b_fused = jnp.concatenate([bq, bk, bv]).reshape(1, Cqkv).astype(jnp.float32)
    gamma_s = gamma.reshape(1).astype(jnp.float32)

    kernel = _make_self_attn_kernel(C, C8, tj)

    out_nc, attn = pl.pallas_call(
        kernel,
        out_shape=(jax.ShapeDtypeStruct((B, N, C), jnp.float32),
                   jax.ShapeDtypeStruct((B, N, N), attn_dtype)),
        grid=(B, N // tj),
        in_specs=[
            pl.BlockSpec(memory_space=pltpu.MemorySpace.SMEM),       # gamma (scalar path)
            pl.BlockSpec((1, N, C), lambda b, j: (b, 0, 0)),         # x (resident per batch)
            pl.BlockSpec((C, Cqkv), lambda b, j: (0, 0)),            # fused Wq|Wk|Wv (bf16)
            pl.BlockSpec((1, Cqkv), lambda b, j: (0, 0)),            # fused bias
        ],
        out_specs=(pl.BlockSpec((1, N, C), lambda b, j: (b, 0, 0)),    # out accumulator
                   pl.BlockSpec((1, N, tj), lambda b, j: (b, 0, j))),  # attention column tile
        scratch_shapes=[pltpu.VMEM((N, C8), jnp.bfloat16),   # q
                        pltpu.VMEM((N, C8), jnp.bfloat16),   # k
                        pltpu.VMEM((N, C), jnp.bfloat16)],   # v
        compiler_params=pltpu.CompilerParams(
            dimension_semantics=("parallel", "arbitrary"),
            vmem_limit_bytes=min(int(vmem_cap * 0.75), 100 * 1024 * 1024),
        ),
    )(gamma_s, x_nc, w_fused, b_fused)

    out = jnp.transpose(out_nc, (0, 2, 1)).reshape(B, C, H, W).astype(x_nchw.dtype)
    return out, attn


def self_attn_ref(x, wq, bq, wk, bk, wv, bv, gamma):
    """Pure-JAX reference mirroring the PyTorch forward exactly (f32)."""
    B, C, H, W = x.shape
    N = H * W
    xf = x.reshape(B, C, N)
    q = jnp.einsum('oc,bcn->bon', wq, xf) + bq[None, :, None]   # (B, C8, N)
    k = jnp.einsum('oc,bcn->bon', wk, xf) + bk[None, :, None]   # (B, C8, N)
    v = jnp.einsum('oc,bcn->bon', wv, xf) + bv[None, :, None]   # (B, C, N)
    energy = jnp.einsum('bci,bcj->bij', q, k)                   # (B, N, N)
    attn = jax.nn.softmax(energy, axis=1)                       # torch Softmax(dim=1)
    out = jnp.einsum('bcj,bij->bci', v, attn).reshape(B, C, H, W)
    return gamma.reshape(()) * out + x, attn


if __name__ == "__main__":
    B, C, H, W = 2, 32, 16, 16          # N = 256 -> exercises 2 column tiles at tj=128
    C8 = C // 8

    key = jax.random.PRNGKey(0)
    kx, kq, kbq, kk, kbk, kv, kbv = jax.random.split(key, 7)

    x = jax.random.normal(kx, (B, C, H, W), dtype=jnp.float32)

    # PyTorch-style init: uniform(-1/sqrt(fan_in), 1/sqrt(fan_in)), fan_in = C
    bound = 1.0 / jnp.sqrt(jnp.float32(C))
    wq = jax.random.uniform(kq, (C8, C), jnp.float32, -bound, bound)
    bq = jax.random.uniform(kbq, (C8,), jnp.float32, -bound, bound)
    wk = jax.random.uniform(kk, (C8, C), jnp.float32, -bound, bound)
    bk = jax.random.uniform(kbk, (C8,), jnp.float32, -bound, bound)
    wv = jax.random.uniform(kv, (C, C), jnp.float32, -bound, bound)
    bv = jax.random.uniform(kbv, (C,), jnp.float32, -bound, bound)
    # module init is gamma = 0 (out == x trivially); use a nonzero gamma so the
    # attention path is actually tested.
    gamma = jnp.array([0.7], dtype=jnp.float32)

    out_r, attn_r = self_attn_ref(x, wq, bq, wk, bk, wv, bv, gamma)

    # 1) explicit column tile (exercises the accumulator across j)
    out, attn = self_attn_pallas(x, wq, bq, wk, bk, wv, bv, gamma, tj=128)
    out = jax.block_until_ready(out)
    attn = jax.block_until_ready(attn)
    assert out.shape == (B, C, H, W) and attn.shape == (B, H * W, H * W)
    assert jnp.allclose(out, out_r, atol=3e-2, rtol=3e-2)
    assert jnp.allclose(attn.astype(jnp.float32), attn_r, atol=2e-2, rtol=2e-2)

    # 2) auto tile sizing from pltpu.get_tpu_info()
    out2, attn2 = self_attn_pallas(x, wq, bq, wk, bk, wv, bv, gamma)
    out2 = jax.block_until_ready(out2)
    attn2 = jax.block_until_ready(attn2)
    assert jnp.allclose(out2, out_r, atol=3e-2, rtol=3e-2)
    assert jnp.allclose(attn2.astype(jnp.float32), attn_r, atol=2e-2, rtol=2e-2)

    print("KERNEL_OK")
</pallas_src>

<mosaic_0001>
module attributes {stable_mosaic.version = 11 : i64} {
  func.func @kernel(%arg0: i32, %arg1: i32, %arg2: memref<1xf32, #tpu.memory_space<smem>>, %arg3: memref<1x256x32xf32, #tpu.memory_space<vmem>>, %arg4: memref<32x40xbf16, #tpu.memory_space<vmem>>, %arg5: memref<1x40xf32, #tpu.memory_space<vmem>>, %arg6: memref<1x256x32xf32, #tpu.memory_space<vmem>>, %arg7: memref<1x256x128xbf16, #tpu.memory_space<vmem>>, %arg8: memref<256x4xbf16, #tpu.memory_space<vmem>>, %arg9: memref<256x4xbf16, #tpu.memory_space<vmem>>, %arg10: memref<256x32xbf16, #tpu.memory_space<vmem>>) attributes {dimension_semantics = [#tpu.dimension_semantics<parallel>, #tpu.dimension_semantics<arbitrary>], iteration_bounds = array<i64: 2, 2>, scalar_prefetch = 0 : i64, scratch_operands = 3 : i64, tpu.core_type = #tpu.core_type<tc>, window_params = [{transform_indices = @transform_0, window_bounds = array<i64: 1>}, {transform_indices = @transform_1, window_bounds = array<i64: 1, 256, 32>}, {pipeline_mode = #tpu.pipeline_mode<synchronous>, transform_indices = @transform_2, window_bounds = array<i64: 32, 40>}, {pipeline_mode = #tpu.pipeline_mode<synchronous>, transform_indices = @transform_3, window_bounds = array<i64: 1, 40>}, {transform_indices = @transform_4, window_bounds = array<i64: 1, 256, 32>}, {transform_indices = @transform_5, window_bounds = array<i64: 1, 256, 128>}]} {
    %c0_i32 = arith.constant 0 : i32
    %0 = arith.cmpi eq, %arg1, %c0_i32 : i32
    %1 = arith.extui %0 : i1 to i32
    %c0_i32_0 = arith.constant 0 : i32
    %2 = arith.cmpi ne, %1, %c0_i32_0 : i32
    scf.if %2 {
      %c0_17 = arith.constant 0 : index
      %c0_18 = arith.constant 0 : index
      %c0_19 = arith.constant 0 : index
      %36 = vector.load %arg3[%c0_17, %c0_18, %c0_19] : memref<1x256x32xf32, #tpu.memory_space<vmem>>, vector<1x256x32xf32>
      %37 = vector.shape_cast %36 : vector<1x256x32xf32> to vector<256x32xf32>
      %38 = arith.truncf %37 : vector<256x32xf32> to vector<256x32xbf16>
      %c0_20 = arith.constant 0 : index
      %c0_21 = arith.constant 0 : index
      %39 = vector.load %arg4[%c0_20, %c0_21] : memref<32x40xbf16, #tpu.memory_space<vmem>>, vector<32x40xbf16>
      %cst_22 = arith.constant dense<0.000000e+00> : vector<256x40xf32>
      %40 = tpu.matmul %38, %39, %cst_22 {dimension_numbers = #tpu.dot_dimension_numbers<[1], [0], [0], [1], [0, 0, 1, 1], [], []>} : vector<256x32xbf16>, vector<32x40xbf16>, vector<256x40xf32> -> vector<256x40xf32>
      %c0_23 = arith.constant 0 : index
      %c0_24 = arith.constant 0 : index
      %41 = vector.load %arg5[%c0_23, %c0_24] : memref<1x40xf32, #tpu.memory_space<vmem>>, vector<1x40xf32>
      %42 = vector.broadcast %41 : vector<1x40xf32> to vector<256x40xf32>
      %43 = arith.addf %40, %42 : vector<256x40xf32>
      %44 = vector.extract_strided_slice %43 {offsets = [0, 0], sizes = [256, 4], strides = [1, 1]} : vector<256x40xf32> to vector<256x4xf32>
      %45 = arith.truncf %44 : vector<256x4xf32> to vector<256x4xbf16>
      %c0_25 = arith.constant 0 : index
      %c0_26 = arith.constant 0 : index
      %46 = vector.load %arg8[%c0_25, %c0_26] : memref<256x4xbf16, #tpu.memory_space<vmem>>, vector<256x4xbf16>
      tpu.vector_store %arg8[%c0_25, %c0_26], %45 {strides = array<i32>} : memref<256x4xbf16, #tpu.memory_space<vmem>>, vector<256x4xbf16>,
      %47 = vector.extract_strided_slice %43 {offsets = [0, 4], sizes = [256, 4], strides = [1, 1]} : vector<256x40xf32> to vector<256x4xf32>
      %48 = arith.truncf %47 : vector<256x4xf32> to vector<256x4xbf16>
      %c0_27 = arith.constant 0 : index
      %c0_28 = arith.constant 0 : index
      %49 = vector.load %arg9[%c0_27, %c0_28] : memref<256x4xbf16, #tpu.memory_space<vmem>>, vector<256x4xbf16>
      tpu.vector_store %arg9[%c0_27, %c0_28], %48 {strides = array<i32>} : memref<256x4xbf16, #tpu.memory_space<vmem>>, vector<256x4xbf16>,
      %50 = vector.extract_strided_slice %43 {offsets = [0, 8], sizes = [256, 32], strides = [1, 1]} : vector<256x40xf32> to vector<256x32xf32>
      %51 = arith.truncf %50 : vector<256x32xf32> to vector<256x32xbf16>
      %c0_29 = arith.constant 0 : index
      %c0_30 = arith.constant 0 : index
      %52 = vector.load %arg10[%c0_29, %c0_30] : memref<256x32xbf16, #tpu.memory_space<vmem>>, vector<256x32xbf16>
      tpu.vector_store %arg10[%c0_29, %c0_30], %51 {strides = array<i32>} : memref<256x32xbf16, #tpu.memory_space<vmem>>, vector<256x32xbf16>,
      %cst_31 = arith.constant 0.000000e+00 : f32
      %53 = vector.broadcast %cst_31 : f32 to vector<1x256x32xf32>
      %c0_32 = arith.constant 0 : index
      %c0_33 = arith.constant 0 : index
      %c0_34 = arith.constant 0 : index
      %54 = vector.load %arg6[%c0_32, %c0_33, %c0_34] : memref<1x256x32xf32, #tpu.memory_space<vmem>>, vector<1x256x32xf32>
      tpu.vector_store %arg6[%c0_32, %c0_33, %c0_34], %53 {strides = array<i32>} : memref<1x256x32xf32, #tpu.memory_space<vmem>>, vector<1x256x32xf32>,
    } else {
    }
    %c128_i32 = arith.constant 128 : i32
    %3 = arith.muli %arg1, %c128_i32 : i32
    %4 = tpu.assume_multiple %3, 128 : i32
    %c0 = arith.constant 0 : index
    %c0_1 = arith.constant 0 : index
    %5 = vector.load %arg8[%c0, %c0_1] : memref<256x4xbf16, #tpu.memory_space<vmem>>, vector<256x4xbf16>
    %6 = arith.index_cast %4 : i32 to index
    %c0_2 = arith.constant 0 : index
    %7 = vector.load %arg9[%6, %c0_2] : memref<256x4xbf16, #tpu.memory_space<vmem>>, vector<128x4xbf16>
    %8 = arith.index_cast %4 : i32 to index
    %c0_3 = arith.constant 0 : index
    %9 = vector.load %arg10[%8, %c0_3] : memref<256x32xbf16, #tpu.memory_space<vmem>>, vector<128x32xbf16>
    %cst = arith.constant dense<0.000000e+00> : vector<256x128xf32>
    %10 = tpu.matmul %5, %7, %cst {dimension_numbers = #tpu.dot_dimension_numbers<[1], [1], [0], [0], [0, 0, 1, 0], [], []>} : vector<256x4xbf16>, vector<128x4xbf16>, vector<256x128xf32> -> vector<256x128xf32>
    %cst_4 = arith.constant dense<0xFF800000> : vector<128xf32>
    %11 = vector.multi_reduction <maximumf>, %10, %cst_4 [0] : vector<256x128xf32> to vector<128xf32>
    %12 = vector.shape_cast %11 : vector<128xf32> to vector<1x128xf32>
    %13 = vector.broadcast %12 : vector<1x128xf32> to vector<256x128xf32>
    %14 = arith.subf %10, %13 : vector<256x128xf32>
    %15 = math.exp %14 : vector<256x128xf32>
    %cst_5 = arith.constant dense<0.000000e+00> : vector<128xf32>
    %16 = vector.multi_reduction <add>, %15, %cst_5 [0] : vector<256x128xf32> to vector<128xf32>
    %17 = vector.shape_cast %16 : vector<128xf32> to vector<1x128xf32>
    %18 = tpu.reciprocal %17 {approx = true} : vector<1x128xf32> -> vector<1x128xf32>
    %19 = vector.broadcast %18 : vector<1x128xf32> to vector<256x128xf32>
    %20 = arith.mulf %15, %19 : vector<256x128xf32>
    %21 = arith.truncf %20 : vector<256x128xf32> to vector<256x128xbf16>
    %c0_6 = arith.constant 0 : index
    %c0_7 = arith.constant 0 : index
    %c0_8 = arith.constant 0 : index
    %22 = vector.load %arg7[%c0_6, %c0_7, %c0_8] : memref<1x256x128xbf16, #tpu.memory_space<vmem>>, vector<1x256x128xbf16>
    %23 = vector.shape_cast %22 : vector<1x256x128xbf16> to vector<256x128xbf16>
    %24 = vector.shape_cast %21 : vector<256x128xbf16> to vector<1x256x128xbf16>
    tpu.vector_store %arg7[%c0_6, %c0_7, %c0_8], %24 {strides = array<i32>} : memref<1x256x128xbf16, #tpu.memory_space<vmem>>, vector<1x256x128xbf16>,
    %25 = arith.truncf %20 : vector<256x128xf32> to vector<256x128xbf16>
    %cst_9 = arith.constant dense<0.000000e+00> : vector<256x32xf32>
    %26 = tpu.matmul %25, %9, %cst_9 {dimension_numbers = #tpu.dot_dimension_numbers<[1], [0], [0], [1], [0, 0, 1, 1], [], []>} : vector<256x128xbf16>, vector<128x32xbf16>, vector<256x32xf32> -> vector<256x32xf32>
    %c0_10 = arith.constant 0 : index
    %c0_11 = arith.constant 0 : index
    %c0_12 = arith.constant 0 : index
    %27 = vector.load %arg6[%c0_10, %c0_11, %c0_12] : memref<1x256x32xf32, #tpu.memory_space<vmem>>, vector<1x256x32xf32>
    %28 = vector.shape_cast %27 : vector<1x256x32xf32> to vector<256x32xf32>
    %29 = arith.addf %28, %26 : vector<256x32xf32>
    %c0_13 = arith.constant 0 : index
    %c0_14 = arith.constant 0 : index
    %c0_15 = arith.constant 0 : index
    %30 = vector.load %arg6[%c0_13, %c0_14, %c0_15] : memref<1x256x32xf32, #tpu.memory_space<vmem>>, vector<1x256x32xf32>
    %31 = vector.shape_cast %30 : vector<1x256x32xf32> to vector<256x32xf32>
    %32 = vector.shape_cast %29 : vector<256x32xf32> to vector<1x256x32xf32>
    tpu.vector_store %arg6[%c0_13, %c0_14, %c0_15], %32 {strides = array<i32>} : memref<1x256x32xf32, #tpu.memory_space<vmem>>, vector<1x256x32xf32>,
    %c1_i32 = arith.constant 1 : i32
    %33 = arith.cmpi eq, %arg1, %c1_i32 : i32
    %34 = arith.extui %33 : i1 to i32
    %c0_i32_16 = arith.constant 0 : i32
    %35 = arith.cmpi ne, %34, %c0_i32_16 : i32
    scf.if %35 {
      %c0_17 = arith.constant 0 : index
      %36 = memref.load %arg2[%c0_17] : memref<1xf32, #tpu.memory_space<smem>>
      %c0_18 = arith.constant 0 : index
      %c0_19 = arith.constant 0 : index
      %c0_20 = arith.constant 0 : index
      %37 = vector.load %arg6[%c0_18, %c0_19, %c0_20] : memref<1x256x32xf32, #tpu.memory_space<vmem>>, vector<1x256x32xf32>
      %38 = vector.shape_cast %37 : vector<1x256x32xf32> to vector<256x32xf32>
      %39 = vector.broadcast %36 : f32 to vector<256x32xf32>
      %40 = arith.mulf %39, %38 : vector<256x32xf32>
      %c0_21 = arith.constant 0 : index
      %c0_22 = arith.constant 0 : index
      %c0_23 = arith.constant 0 : index
      %41 = vector.load %arg3[%c0_21, %c0_22, %c0_23] : memref<1x256x32xf32, #tpu.memory_space<vmem>>, vector<1x256x32xf32>
      %42 = vector.shape_cast %41 : vector<1x256x32xf32> to vector<256x32xf32>
      %43 = arith.addf %40, %42 : vector<256x32xf32>
      %c0_24 = arith.constant 0 : index
      %c0_25 = arith.constant 0 : index
      %c0_26 = arith.constant 0 : index
      %44 = vector.load %arg6[%c0_24, %c0_25, %c0_26] : memref<1x256x32xf32, #tpu.memory_space<vmem>>, vector<1x256x32xf32>
      %45 = vector.shape_cast %44 : vector<1x256x32xf32> to vector<256x32xf32>
      %46 = vector.shape_cast %43 : vector<256x32xf32> to vector<1x256x32xf32>
      tpu.vector_store %arg6[%c0_24, %c0_25, %c0_26], %46 {strides = array<i32>} : memref<1x256x32xf32, #tpu.memory_space<vmem>>, vector<1x256x32xf32>,
    } else {
    }
    return
  }
  func.func @transform_0(%arg0: i32, %arg1: i32) -> i32 {
    %c0_i32 = arith.constant 0 : i32
    %c0_i32_0 = arith.constant 0 : i32
    return %c0_i32 : i32
  }
  func.func @transform_1(%arg0: i32, %arg1: i32) -> (i32, i32, i32) {
    %c0_i32 = arith.constant 0 : i32
    %c0_i32_0 = arith.constant 0 : i32
    %c0_i32_1 = arith.constant 0 : i32
    return %arg0, %c0_i32, %c0_i32_0 : i32, i32, i32
  }
  func.func @transform_2(%arg0: i32, %arg1: i32) -> (i32, i32) {
    %c0_i32 = arith.constant 0 : i32
    %c0_i32_0 = arith.constant 0 : i32
    %c0_i32_1 = arith.constant 0 : i32
    return %c0_i32, %c0_i32_0 : i32, i32
  }
  func.func @transform_3(%arg0: i32, %arg1: i32) -> (i32, i32) {
    %c0_i32 = arith.constant 0 : i32
    %c0_i32_0 = arith.constant 0 : i32
    %c0_i32_1 = arith.constant 0 : i32
    return %c0_i32, %c0_i32_0 : i32, i32
  }
  func.func @transform_4(%arg0: i32, %arg1: i32) -> (i32, i32, i32) {
    %c0_i32 = arith.constant 0 : i32
    %c0_i32_0 = arith.constant 0 : i32
    %c0_i32_1 = arith.constant 0 : i32
    return %arg0, %c0_i32, %c0_i32_0 : i32, i32, i32
  }
  func.func @transform_5(%arg0: i32, %arg1: i32) -> (i32, i32, i32) {
    %c0_i32 = arith.constant 0 : i32
    %c0_i32_0 = arith.constant 0 : i32
    return %arg0, %c0_i32, %arg1 : i32, i32, i32
  }
}

</mosaic_0001>

<llo_original>
// kernel: self_attn_pallas.1
$region0: #{self_attn_pallas.1}
  #allocation0 [shape = 'u32[]', space=smem, size = 0x4, offset = 0x4, fixed_abs, tag = 'smem constant byte address 0x4 - core index']
  #allocation1 [shape = 'u32[144,128]{1,0:T(1,128)}', space=vmem, size = 0x12000, scoped, tag = 'internal scratch']
  #allocation2 [shape = 'bf16[256,4]{1,0:T(8,128)(2,1)}', space=vmem, size = 0x10000, scoped, tag = 'scratch operand']
  #allocation3 [shape = 'bf16[256,4]{1,0:T(8,128)(2,1)}', space=vmem, size = 0x10000, scoped, tag = 'scratch operand']
  #allocation4 [shape = 'bf16[256,32]{1,0:T(8,128)(2,1)}', space=vmem, size = 0x10000, scoped, tag = 'scratch operand']
  #allocation5 [shape = 'f32[1]{0:T(128)S(6)}', space=smem, size = 0x200, scoped, tag = 'scoped memory for self_attn_pallas.1']
  %s0 = inlined_call_operand.<no memory space> [shape: f32[1], index: 0, kind: input, shape index: {}]
  %s1 = inlined_call_operand.hbm [shape: f32[2,256,32], index: 1, kind: input, shape index: {}]
  %s2 = inlined_call_operand.vmem [shape: bf16[32,40], index: 2, kind: input, shape index: {}]
  %s3 = inlined_call_operand.vmem [shape: f32[1,40], index: 3, kind: input, shape index: {}]
  %s4 = inlined_call_operand.hbm [shape: f32[2,256,32], index: 4, kind: output, shape index: {0}]
  %s5 = inlined_call_operand.hbm [shape: bf16[2,256,256], index: 5, kind: output, shape index: {1}]
  %6 = xla_tuple %s4, %s5
  %s7 = sld [smem:[#allocation0]]
  $region69: #{self_attn_pallas.1} parent=0
    _
  %s9 = ssub.s32 1, %s7
  %s10 = scalar_select 0, %s9, %s7
  %11 = sst [smem:[#allocation5]] %s0
  $region1: #{self_attn_pallas.1} parent=0
    #allocation6 [shape = 'u8[262144]{0}', space=vmem, size = 0x40000, scoped, tag = 'input window, operand 1']
    #allocation7 [shape = 's32[2]{0}', space=sflag, size = 0x8, scoped, tag = 'scoped memory for self_attn_pallas.1']
    #allocation8 [shape = 's32[2]{0}', space=sflag, size = 0x8, scoped, tag = 'scoped memory for self_attn_pallas.1']
    #allocation9 [shape = 'u8[262144]{0}', space=vmem, size = 0x40000, scoped, tag = 'output window, operand 0']
    #allocation10 [shape = 'u8[131072]{0}', space=vmem, size = 0x20000, scoped, tag = 'output window, operand 1']
    #allocation11 [shape = 's32[2]{0}', space=sflag, size = 0x8, scoped, tag = 'scoped memory for self_attn_pallas.1']
    %12 = vsyncpa [#allocation7], 0
    %s13 = scalar_lea.sflag [#allocation7], 1
    %14 = vsyncpa %s13, 0
    %15 = vsyncpa [#allocation8], 0
    %s16 = scalar_lea.sflag [#allocation8], 1
    %17 = vsyncpa %s16, 0
    %18 = vsyncpa [#allocation11], 0
    %s19 = scalar_lea.sflag [#allocation11], 1
    %20 = vsyncpa %s19, 0
    loop: start=0, step=1, limit=6
    $region2: #{self_attn_pallas.1} parent=1 // loop_pre_header
      _
    $region3: #{self_attn_pallas.1} parent=1 // loop_header
      %s22 = sphi 0, %s26
      %p23 = scmp.ge.s32.totalorder %s22, 6
      %s29 = sphi 0, %s41
      %s30 = sphi 0, %s37
      %s31 = sphi 0, %s29
      %s32 = sphi 0, %s30
      %s33 = sphi 0, %s31
      %s34 = sphi 0, %s32
      %s42 = sphi 0, %s42
      %s44 = sphi 0, %s42
      %s45 = sphi 0, %s44
      %s59 = sphi 0, %s45
      %s65 = sphi 0, %s67
      %s68 = sphi 0, %s65
      %s69 = sphi 0, %s68
      %s85 = sphi 0, %s69
      %s89 = sphi 0, %s89
      %s91 = sphi 0, %s89
      %s92 = sphi 0, %s91
      %s106 = sphi 0, %s92
      %s110 = sphi 0, %s110
      %s112 = sphi 0, %s110
      %s113 = sphi 0, %s112
      %s127 = sphi 0, %s113
      %s133 = sphi 0, %s135
      %s136 = sphi 0, %s133
      %s137 = sphi 0, %s136
      %s153 = sphi 0, %s137
      %s161 = sphi 0, %s163
      %s164 = sphi 0, %s161
      %s165 = sphi 0, %s164
      %s181 = sphi 0, %s165
    $region4: #{self_attn_pallas.1} parent=1 // loop_header_branch
      %25 = sbr.rel (%p23) target = $region8
    $region5: #{self_attn_pallas.1} parent=1 // loop_body
      %s27 = ssub.s32 %s22, 1
      %s28 = ssub.s32 %s22, 2
      %s35 = sadd.s32 1, %s30
      %p36 = scmp.ge.s32.totalorder %s35, 2
      %s37 = scalar_select %p36, 0, %s35
      %s38 = sadd.s32 1, %s29
      %s39 = scalar_select %p36, %s38, %s29
      %p40 = scmp.ge.s32.totalorder %s39, 2
      %s41 = scalar_select %p40, 0, %s39
      %s43 = sadd.s32 %s42, 1
      %p46 = scmp.eq.s32.totalorder %s22, 3
      %p47 = scmp.ne.s32.totalorder %s42, %s44
      %p48 = scmp.eq.s32.totalorder %s22, 0
      %p49 = por %p47, %p48
      %p50 = scmp.ne.s32.totalorder %s42, %s44
      %p51 = scmp.eq.s32.totalorder %s27, 3
      %p52 = por %p50, %p51
      %p53 = scmp.ne.s32.totalorder %s44, %s45
      %p54 = scmp.eq.s32.totalorder %s27, 0
      %p55 = por %p53, %p54
      %p56 = scmp.ne.s32.totalorder %s44, %s45
      %p57 = scmp.eq.s32.totalorder %s28, 3
      %p58 = por %p56, %p57
      %p60 = scmp.ne.s32.totalorder %s45, %s59
      %p61 = scmp.eq.s32.totalorder %s28, 0
      %p62 = por %p60, %p61
      %s63 = ssub.s32 %s29, %s41
      %p64 = scmp.eq.s32.totalorder %s63, 0
      %s66 = sadd.s32 %s65, 1
      %s67 = scalar_select %p64, %s65, %s66
      %p70 = pneg %p64
      %p71 = scmp.eq.s32.totalorder %s22, 3
      %p72 = por %p70, %p71
      %p73 = scmp.ne.s32.totalorder %s65, %s68
      %p74 = scmp.eq.s32.totalorder %s22, 0
      %p75 = por %p73, %p74
      %p76 = scmp.ne.s32.totalorder %s65, %s68
      %p77 = scmp.eq.s32.totalorder %s27, 3
      %p78 = por %p76, %p77
      %p79 = scmp.ne.s32.totalorder %s68, %s69
      %p80 = scmp.eq.s32.totalorder %s27, 0
      %p81 = por %p79, %p80
      %p82 = scmp.ne.s32.totalorder %s68, %s69
      %p83 = scmp.eq.s32.totalorder %s28, 3
      %p84 = por %p82, %p83
      %p86 = scmp.ne.s32.totalorder %s69, %s85
      %p87 = scmp.eq.s32.totalorder %s28, 0
      %p88 = por %p86, %p87
      %s90 = sadd.s32 %s89, 1
      %p93 = scmp.eq.s32.totalorder %s22, 3
      %p94 = scmp.ne.s32.totalorder %s89, %s91
      %p95 = scmp.eq.s32.totalorder %s22, 0
      %p96 = por %p94, %p95
      %p97 = scmp.ne.s32.totalorder %s89, %s91
      %p98 = scmp.eq.s32.totalorder %s27, 3
      %p99 = por %p97, %p98
      %p100 = scmp.ne.s32.totalorder %s91, %s92
      %p101 = scmp.eq.s32.totalorder %s27, 0
      %p102 = por %p100, %p101
      %p103 = scmp.ne.s32.totalorder %s91, %s92
      %p104 = scmp.eq.s32.totalorder %s28, 3
      %p105 = por %p103, %p104
      %p107 = scmp.ne.s32.totalorder %s92, %s106
      %p108 = scmp.eq.s32.totalorder %s28, 0
      %p109 = por %p107, %p108
      %s111 = sadd.s32 %s110, 1
      %p114 = scmp.eq.s32.totalorder %s22, 3
      %p115 = scmp.ne.s32.totalorder %s110, %s112
      %p116 = scmp.eq.s32.totalorder %s22, 0
      %p117 = por %p115, %p116
      %p118 = scmp.ne.s32.totalorder %s110, %s112
      %p119 = scmp.eq.s32.totalorder %s27, 3
      %p120 = por %p118, %p119
      %p121 = scmp.ne.s32.totalorder %s112, %s113
      %p122 = scmp.eq.s32.totalorder %s27, 0
      %p123 = por %p121, %p122
      %p124 = scmp.ne.s32.totalorder %s112, %s113
      %p125 = scmp.eq.s32.totalorder %s28, 3
      %p126 = por %p124, %p125
      %p128 = scmp.ne.s32.totalorder %s113, %s127
      %p129 = scmp.eq.s32.totalorder %s28, 0
      %p130 = por %p128, %p129
      %s131 = ssub.s32 %s29, %s41
      %p132 = scmp.eq.s32.totalorder %s131, 0
      %s134 = sadd.s32 %s133, 1
      %s135 = scalar_select %p132, %s133, %s134
      %p138 = pneg %p132
      %p139 = scmp.eq.s32.totalorder %s22, 3
      %p140 = por %p138, %p139
      %p141 = scmp.ne.s32.totalorder %s133, %s136
      %p142 = scmp.eq.s32.totalorder %s22, 0
      %p143 = por %p141, %p142
      %p144 = scmp.ne.s32.totalorder %s133, %s136
      %p145 = scmp.eq.s32.totalorder %s27, 3
      %p146 = por %p144, %p145
      %p147 = scmp.ne.s32.totalorder %s136, %s137
      %p148 = scmp.eq.s32.totalorder %s27, 0
      %p149 = por %p147, %p148
      %p150 = scmp.ne.s32.totalorder %s136, %s137
      %p151 = scmp.eq.s32.totalorder %s28, 3
      %p152 = por %p150, %p151
      %p154 = scmp.ne.s32.totalorder %s137, %s153
      %p155 = scmp.eq.s32.totalorder %s28, 0
      %p156 = por %p154, %p155
      %s157 = ssub.s32 %s29, %s41
      %s158 = ssub.s32 %s30, %s37
      %s159 = sor.u32 %s157, %s158
      %p160 = scmp.eq.s32.totalorder %s159, 0
      %s162 = sadd.s32 %s161, 1
      %s163 = scalar_select %p160, %s161, %s162
      %p166 = pneg %p160
      %p167 = scmp.eq.s32.totalorder %s22, 3
      %p168 = por %p166, %p167
      %p169 = scmp.ne.s32.totalorder %s161, %s164
      %p170 = scmp.eq.s32.totalorder %s22, 0
      %p171 = por %p169, %p170
      %p172 = scmp.ne.s32.totalorder %s161, %s164
      %p173 = scmp.eq.s32.totalorder %s27, 3
      %p174 = por %p172, %p173
      %p175 = scmp.ne.s32.totalorder %s164, %s165
      %p176 = scmp.eq.s32.totalorder %s27, 0
      %p177 = por %p175, %p176
      %p178 = scmp.ne.s32.totalorder %s164, %s165
      %p179 = scmp.eq.s32.totalorder %s28, 3
      %p180 = por %p178, %p179
      %p182 = scmp.ne.s32.totalorder %s165, %s181
      %p183 = scmp.eq.s32.totalorder %s28, 0
      %p184 = por %p182, %p183
      %p185 = scmp.le.s32.totalorder 1, %s22
      %p186 = scmp.lt.s32.totalorder %s22, 5
      %p187 = pnand %p185, %p186
      %p188 = pneg %p187
      // Predicated region
      $region9: #{self_attn_pallas.1} parent=5 // pred_check
        _
      $region10: #{self_attn_pallas.1} parent=5 // pred_check_branch
        %190 = sbr.rel (%p187) target = $region12
      $region11: #{self_attn_pallas.1} parent=5 // pred_region
        %s191 = ssub.s32 %s22, 1
        // Predicated region
        $region13: #{self_attn_pallas.1} parent=11 // pred_check
          %p192 = pneg %p55
        $region14: #{self_attn_pallas.1} parent=11 // pred_check_branch
          %194 = sbr.rel (%p192) target = $region16
        $region15: #{self_attn_pallas.1} parent=11 // pred_region
          _
        $region16: #{self_attn_pallas.1} parent=11 // pred_fallthru
          _
        // Predicated region
        $region17: #{self_attn_pallas.1} parent=11 // pred_check
          %p195 = pneg %p102
        $region18: #{self_attn_pallas.1} parent=11 // pred_check_branch
          %197 = sbr.rel (%p195) target = $region20
        $region19: #{self_attn_pallas.1} parent=11 // pred_region
          _
        $region20: #{self_attn_pallas.1} parent=11 // pred_fallthru
          _
        // Predicated region
        $region21: #{self_attn_pallas.1} parent=11 // pred_check
          %p198 = pneg %p123
        $region22: #{self_attn_pallas.1} parent=11 // pred_check_branch
          %200 = sbr.rel (%p198) target = $region24
        $region23: #{self_attn_pallas.1} parent=11 // pred_region
          _
        $region24: #{self_attn_pallas.1} parent=11 // pred_fallthru
          _
      $region12: #{self_attn_pallas.1} parent=5 // pred_fallthru
        _
      %p201 = scmp.lt.s32.totalorder %s22, 4
      // Predicated region
      $region25: #{self_attn_pallas.1} parent=5 // pred_check
        %p202 = pneg %p201
      $region26: #{self_attn_pallas.1} parent=5 // pred_check_branch
        %204 = sbr.rel (%p202) target = $region28
      $region27: #{self_attn_pallas.1} parent=5 // pred_region
        // Predicated region
        $region29: #{self_attn_pallas.1} parent=27 // pred_check
          %p205 = pneg %p75
        $region30: #{self_attn_pallas.1} parent=27 // pred_check_branch
          %207 = sbr.rel (%p205) target = $region32
        $region31: #{self_attn_pallas.1} parent=27 // pred_region
          %s208 = sand.u32 %s65, 1
          %s209 = scalar_lea.sflag [#allocation7], %s208
          %s210 = sand.u32 %s65, 1
          %s211 = smul.addr %s210, 256
          %s212 = scalar_lea.vmem [#allocation6], %s211
          %s214 = ssub.s32 4096, 4096
          %215 = vsyncadd %s209, %s214
          %s216 = smul.addr %s29, 32
          %s217 = smul.addr %s216, 128
          %s218 = scalar_lea.hbm %s1, %s217
          %s219 = sshll.u32 %s212, 4
          %s220 = int_to_ptr.vmem [resolvable:$true] %s219
          %225 = dma.hbm_to_vmem [thread:$0]  %s218, 4096, %s220, %s209, 128, 128, 8
        $region32: #{self_attn_pallas.1} parent=27 // pred_fallthru
          _
      $region28: #{self_attn_pallas.1} parent=5 // pred_fallthru
        _
      %p226 = scmp.le.s32.totalorder 1, %s22
      %p227 = scmp.lt.s32.totalorder %s22, 5
      %p228 = pnand %p226, %p227
      %p229 = pneg %p228
      // Predicated region
      $region33: #{self_attn_pallas.1} parent=5 // pred_check
        _
      $region34: #{self_attn_pallas.1} parent=5 // pred_check_branch
        %231 = sbr.rel (%p228) target = $region36
      $region35: #{self_attn_pallas.1} parent=5 // pred_region
        %s232 = ssub.s32 %s22, 1
        %s233 = sand.u32 %s68, 1
        %s234 = scalar_lea.sflag [#allocation7], %s233
        %s235 = sand.u32 %s68, 1
        %s236 = smul.addr %s235, 256
        %s237 = scalar_lea.vmem [#allocation6], %s236
        // Predicated region
        $region37: #{self_attn_pallas.1} parent=35 // pred_check
          %p238 = pneg %p81
        $region38: #{self_attn_pallas.1} parent=35 // pred_check_branch
          %240 = sbr.rel (%p238) target = $region40
        $region39: #{self_attn_pallas.1} parent=35 // pred_region
          %241 = dma.done %s234, 4096
        $region40: #{self_attn_pallas.1} parent=35 // pred_fallthru
          _
        %p242 = pneg %p55
        %p243 = pneg %p52
        %s244 = sand.u32 %s68, 1
        %s245 = scalar_lea.sflag [#allocation7], %s244
        %s246 = sand.u32 %s68, 1
        %s247 = smul.addr %s246, 256
        %s248 = scalar_lea.vmem [#allocation6], %s247
        %p249 = pneg %p81
        %p250 = pneg %p78
        %p251 = pneg %p102
        %p252 = pneg %p99
        %p253 = pneg %p123
        %p254 = pneg %p120
        %p255 = pneg %p149
        %p256 = pneg %p146
        %s257 = sand.u32 %s136, 1
        %s258 = scalar_lea.sflag [#allocation8], %s257
        %s259 = sand.u32 %s136, 1
        %s260 = smul.addr %s259, 256
        %s261 = scalar_lea.vmem [#allocation9], %s260
        %p262 = pneg %p177
        %p263 = pneg %p174
        %s264 = sand.u32 %s164, 1
        %s265 = scalar_lea.sflag [#allocation11], %s264
        %s266 = sand.u32 %s164, 1
        %s267 = smul.addr %s266, 128
        %s268 = scalar_lea.vmem [#allocation10], %s267
        %p270 = scmp.eq.s32.totalorder %s32, 0
        // Predicated region
        $region41: #{self_attn_pallas.1} parent=35 // pred_check
          %p271 = pneg %p270
        $region42: #{self_attn_pallas.1} parent=35 // pred_check_branch
          %273 = sbr.rel (%p271) target = $region44
        $region43: #{self_attn_pallas.1} parent=35 // pred_region
          %v274 = vld [vmem:[%s237] sm:$0xff]
          %v275 = vld [vmem:[%s237 + $0x8] sm:$0xff]
          %v276 = vld [vmem:[%s237 + $0x10] sm:$0xff]
          %v277 = vld [vmem:[%s237 + $0x18] sm:$0xff]
          %v278 = vld [vmem:[%s237 + $0x20] sm:$0xff]
          %v279 = vld [vmem:[%s237 + $0x28] sm:$0xff]
          %v280 = vld [vmem:[%s237 + $0x30] sm:$0xff]
          %v281 = vld [vmem:[%s237 + $0x38] sm:$0xff]
          %v282 = vld [vmem:[%s237 + $0x40] sm:$0xff]
          %v283 = vld [vmem:[%s237 + $0x48] sm:$0xff]
          %v284 = vld [vmem:[%s237 + $0x50] sm:$0xff]
          %v285 = vld [vmem:[%s237 + $0x58] sm:$0xff]
          %v286 = vld [vmem:[%s237 + $0x60] sm:$0xff]
          %v287 = vld [vmem:[%s237 + $0x68] sm:$0xff]
          %v288 = vld [vmem:[%s237 + $0x70] sm:$0xff]
          %v289 = vld [vmem:[%s237 + $0x78] sm:$0xff]
          %v290 = vld [vmem:[%s237 + $0x80] sm:$0xff]
          %v291 = vld [vmem:[%s237 + $0x88] sm:$0xff]
          %v292 = vld [vmem:[%s237 + $0x90] sm:$0xff]
          %v293 = vld [vmem:[%s237 + $0x98] sm:$0xff]
          %v294 = vld [vmem:[%s237 + $0xa0] sm:$0xff]
          %v295 = vld [vmem:[%s237 + $0xa8] sm:$0xff]
          %v296 = vld [vmem:[%s237 + $0xb0] sm:$0xff]
          %v297 = vld [vmem:[%s237 + $0xb8] sm:$0xff]
          %v298 = vld [vmem:[%s237 + $0xc0] sm:$0xff]
          %v299 = vld [vmem:[%s237 + $0xc8] sm:$0xff]
          %v300 = vld [vmem:[%s237 + $0xd0] sm:$0xff]
          %v301 = vld [vmem:[%s237 + $0xd8] sm:$0xff]
          %v302 = vld [vmem:[%s237 + $0xe0] sm:$0xff]
          %v303 = vld [vmem:[%s237 + $0xe8] sm:$0xff]
          %v304 = vld [vmem:[%s237 + $0xf0] sm:$0xff]
          %v305 = vld [vmem:[%s237 + $0xf8] sm:$0xff]
          %v306 = vpack.c.bf16 %v275, %v274
          %v307 = vpack.c.bf16 %v277, %v276
          %v308 = vpack.c.bf16 %v279, %v278
          %v309 = vpack.c.bf16 %v281, %v280
          %v310 = vpack.c.bf16 %v283, %v282
          %v311 = vpack.c.bf16 %v285, %v284
          %v312 = vpack.c.bf16 %v287, %v286
          %v313 = vpack.c.bf16 %v289, %v288
          %v314 = vpack.c.bf16 %v291, %v290
          %v315 = vpack.c.bf16 %v293, %v292
          %v316 = vpack.c.bf16 %v295, %v294
          %v317 = vpack.c.bf16 %v297, %v296
          %v318 = vpack.c.bf16 %v299, %v298
          %v319 = vpack.c.bf16 %v301, %v300
          %v320 = vpack.c.bf16 %v303, %v302
          %v321 = vpack.c.bf16 %v305, %v304
          %v322 = vld [vmem:[%s2] sm:$0xf]
          %v323 = vld [vmem:[%s2 + $0x4] sm:$0xf]
          %v324 = vld [vmem:[%s2 + $0x8] sm:$0xf]
          %v325 = vld [vmem:[%s2 + $0xc] sm:$0xf]
          %v326 = vld [vmem:[%s3] sm:$0x1]
          %v328 = vlaneseq
          %v329 = vshrl.u32 %v328, 7
          %v330 = vsub.s32 0, %v329
          %v331 = vrot.slane %v326, %v330
          %v337 = vunpack.c.l.b16 %v322
          %v338 = vunpack.c.l.b16 %v323
          %v339 = vunpack.c.l.b16 %v324
          %v340 = vunpack.c.l.b16 %v325
          %v341 = vpack.c.b16 %v338, %v337
          %v342 = vpack.c.b16 %v340, %v339
          %vm345 = vcmask 261120
          %v347 = vsel %vm345, %v306, 0
          %v350 = vsel %vm345, %v307, 0
          %v353 = vsel %vm345, %v308, 0
          %v356 = vsel %vm345, %v309, 0
          %v359 = vsel %vm345, %v310, 0
          %v362 = vsel %vm345, %v311, 0
          %v365 = vsel %vm345, %v312, 0
          %v368 = vsel %vm345, %v313, 0
          %v371 = vsel %vm345, %v314, 0
          %v374 = vsel %vm345, %v315, 0
          %v377 = vsel %vm345, %v316, 0
          %v380 = vsel %vm345, %v317, 0
          %v383 = vsel %vm345, %v318, 0
          %v386 = vsel %vm345, %v319, 0
          %v389 = vsel %vm345, %v320, 0
          %v392 = vsel %vm345, %v321, 0
          %394 = vmatprep.subr.bf16.mxu0 0
          %395 = vmatpush1.bf16.msra.mxu0 0
          %396 = vmatprep.subr.bf16.mxu0 0
          %397 = vmatpush1.bf16.msra.mxu0 0
          %398 = vmatprep.subr.bf16.mxu0 0
          %399 = vmatpush1.bf16.msra.mxu0 0
          %400 = vmatprep.subr.bf16.mxu0 0
          %401 = vmatpush1.bf16.msra.mxu0 0
          %402 = vmatprep.subr.bf16.mxu0 0
          %403 = vmatpush1.bf16.msra.mxu0 0
          %404 = vmatprep.subr.bf16.mxu0 0
          %405 = vmatpush1.bf16.msra.mxu0 0
          %406 = vmatprep.subr.bf16.mxu0 0
          %407 = vmatpush1.bf16.msra.mxu0 %v342
          %408 = vmatprep.subr.bf16.mxu0 0
          %409 = vmatpush1.bf16.msra.mxu0 %v341
          %410 = vmatprep.subr.bf16.mxu0 0
          %411 = vmatpush2.bf16.msra.mxu0 0
          %412 = vmatprep.subr.bf16.mxu0 0
          %413 = vmatpush2.bf16.msra.mxu0 0
          %414 = vmatprep.subr.bf16.mxu0 0
          %415 = vmatpush2.bf16.msra.mxu0 0
          %416 = vmatprep.subr.bf16.mxu0 0
          %417 = vmatpush2.bf16.msra.mxu0 0
          %418 = vmatprep.subr.bf16.mxu0 0
          %419 = vmatpush2.bf16.msra.mxu0 0
          %420 = vmatprep.subr.bf16.mxu0 0
          %421 = vmatpush2.bf16.msra.mxu0 0
          %422 = vmatprep.subr.bf16.mxu0 0
          %423 = vmatpush2.bf16.msra.mxu0 0
          %424 = vmatprep.subr.bf16.mxu0 0
          %425 = vmatpush2.bf16.msra.mxu0 0
          %426 = vmatprep.mubr.bf16.mxu0 0
          %427 = vmatmul.mubr.bf16.gmra.mxu0 %v347
          %v428 = vpop.f32.mrf.mxu0
          %v429 = vadd.f32 %v331, %v428
          %v430 = vpop.f32.mrf.mxu0
          %v431 = vpop.f32.mrf.mxu0
          %v432 = vadd.f32 %v331, %v431
          %v433 = vpop.f32.mrf.mxu0
          %434 = vmatprep.mubr.bf16.mxu0 0
          %435 = vmatmul.mubr.bf16.gmra.mxu0 %v350
          %v436 = vpop.f32.mrf.mxu0
          %v437 = vadd.f32 %v331, %v436
          %v438 = vpop.f32.mrf.mxu0
          %v439 = vpop.f32.mrf.mxu0
          %v440 = vadd.f32 %v331, %v439
          %v441 = vpop.f32.mrf.mxu0
          %442 = vmatprep.mubr.bf16.mxu0 0
          %443 = vmatmul.mubr.bf16.gmra.mxu0 %v353
          %v444 = vpop.f32.mrf.mxu0
          %v445 = vadd.f32 %v331, %v444
          %v446 = vpop.f32.mrf.mxu0
          %v447 = vpop.f32.mrf.mxu0
          %v448 = vadd.f32 %v331, %v447
          %v449 = vpop.f32.mrf.mxu0
          %450 = vmatprep.mubr.bf16.mxu0 0
          %451 = vmatmul.mubr.bf16.gmra.mxu0 %v356
          %v452 = vpop.f32.mrf.mxu0
          %v453 = vadd.f32 %v331, %v452
          %v454 = vpop.f32.mrf.mxu0
          %v455 = vpop.f32.mrf.mxu0
          %v456 = vadd.f32 %v331, %v455
          %v457 = vpop.f32.mrf.mxu0
          %458 = vmatprep.mubr.bf16.mxu0 0
          %459 = vmatmul.mubr.bf16.gmra.mxu0 %v359
          %v460 = vpop.f32.mrf.mxu0
          %v461 = vadd.f32 %v331, %v460
          %v462 = vpop.f32.mrf.mxu0
          %v463 = vpop.f32.mrf.mxu0
          %v464 = vadd.f32 %v331, %v463
          %v465 = vpop.f32.mrf.mxu0
          %466 = vmatprep.mubr.bf16.mxu0 0
          %467 = vmatmul.mubr.bf16.gmra.mxu0 %v362
          %v468 = vpop.f32.mrf.mxu0
          %v469 = vadd.f32 %v331, %v468
          %v470 = vpop.f32.mrf.mxu0
          %v471 = vpop.f32.mrf.mxu0
          %v472 = vadd.f32 %v331, %v471
          %v473 = vpop.f32.mrf.mxu0
          %474 = vmatprep.mubr.bf16.mxu0 0
          %475 = vmatmul.mubr.bf16.gmra.mxu0 %v365
          %v476 = vpop.f32.mrf.mxu0
          %v477 = vadd.f32 %v331, %v476
          %v478 = vpop.f32.mrf.mxu0
          %v479 = vpop.f32.mrf.mxu0
          %v480 = vadd.f32 %v331, %v479
          %v481 = vpop.f32.mrf.mxu0
          %482 = vmatprep.mubr.bf16.mxu0 0
          %483 = vmatmul.mubr.bf16.gmra.mxu0 %v368
          %v484 = vpop.f32.mrf.mxu0
          %v485 = vadd.f32 %v331, %v484
          %v486 = vpop.f32.mrf.mxu0
          %v487 = vpop.f32.mrf.mxu0
          %v488 = vadd.f32 %v331, %v487
          %v489 = vpop.f32.mrf.mxu0
          %490 = vmatprep.mubr.bf16.mxu0 0
          %491 = vmatmul.mubr.bf16.gmra.mxu0 %v371
          %v492 = vpop.f32.mrf.mxu0
          %v493 = vadd.f32 %v331, %v492
          %v494 = vpop.f32.mrf.mxu0
          %v495 = vpop.f32.mrf.mxu0
          %v496 = vadd.f32 %v331, %v495
          %v497 = vpop.f32.mrf.mxu0
          %498 = vmatprep.mubr.bf16.mxu0 0
          %499 = vmatmul.mubr.bf16.gmra.mxu0 %v374
          %v500 = vpop.f32.mrf.mxu0
          %v501 = vadd.f32 %v331, %v500
          %v502 = vpop.f32.mrf.mxu0
          %v503 = vpop.f32.mrf.mxu0
          %v504 = vadd.f32 %v331, %v503
          %v505 = vpop.f32.mrf.mxu0
          %506 = vmatprep.mubr.bf16.mxu0 0
          %507 = vmatmul.mubr.bf16.gmra.mxu0 %v377
          %v508 = vpop.f32.mrf.mxu0
          %v509 = vadd.f32 %v331, %v508
          %v510 = vpop.f32.mrf.mxu0
          %v511 = vpop.f32.mrf.mxu0
          %v512 = vadd.f32 %v331, %v511
          %v513 = vpop.f32.mrf.mxu0
          %514 = vmatprep.mubr.bf16.mxu0 0
          %515 = vmatmul.mubr.bf16.gmra.mxu0 %v380
          %v516 = vpop.f32.mrf.mxu0
          %v517 = vadd.f32 %v331, %v516
          %v518 = vpop.f32.mrf.mxu0
          %v519 = vpop.f32.mrf.mxu0
          %v520 = vadd.f32 %v331, %v519
          %v521 = vpop.f32.mrf.mxu0
          %522 = vmatprep.mubr.bf16.mxu0 0
          %523 = vmatmul.mubr.bf16.gmra.mxu0 %v383
          %v524 = vpop.f32.mrf.mxu0
          %v525 = vadd.f32 %v331, %v524
          %v526 = vpop.f32.mrf.mxu0
          %v527 = vpop.f32.mrf.mxu0
          %v528 = vadd.f32 %v331, %v527
          %v529 = vpop.f32.mrf.mxu0
          %530 = vmatprep.mubr.bf16.mxu0 0
          %531 = vmatmul.mubr.bf16.gmra.mxu0 %v386
          %v532 = vpop.f32.mrf.mxu0
          %v533 = vadd.f32 %v331, %v532
          %v534 = vpop.f32.mrf.mxu0
          %v535 = vpop.f32.mrf.mxu0
          %v536 = vadd.f32 %v331, %v535
          %v537 = vpop.f32.mrf.mxu0
          %538 = vmatprep.mubr.bf16.mxu0 0
          %539 = vmatmul.mubr.bf16.gmra.mxu0 %v389
          %v540 = vpop.f32.mrf.mxu0
          %v541 = vadd.f32 %v331, %v540
          %v542 = vpop.f32.mrf.mxu0
          %v543 = vpop.f32.mrf.mxu0
          %v544 = vadd.f32 %v331, %v543
          %v545 = vpop.f32.mrf.mxu0
          %546 = vmatprep.mubr.bf16.mxu0 0
          %547 = vmatmul.mubr.bf16.gmra.mxu0 %v392
          %v548 = vpop.f32.mrf.mxu0
          %v549 = vadd.f32 %v331, %v548
          %v550 = vpop.f32.mrf.mxu0
          %v551 = vpop.f32.mrf.mxu0
          %v552 = vadd.f32 %v331, %v551
          %v553 = vpop.f32.mrf.mxu0
          %554 = vdwg.mxu0
          %v555 = vpack.c.bf16 %v432, %v429
          %v556 = vpack.c.bf16 %v440, %v437
          %v557 = vpack.c.bf16 %v448, %v445
          %v558 = vpack.c.bf16 %v456, %v453
          %v559 = vpack.c.bf16 %v464, %v461
          %v560 = vpack.c.bf16 %v472, %v469
          %v561 = vpack.c.bf16 %v480, %v477
          %v562 = vpack.c.bf16 %v488, %v485
          %v563 = vpack.c.bf16 %v496, %v493
          %v564 = vpack.c.bf16 %v504, %v501
          %v565 = vpack.c.bf16 %v512, %v509
          %v566 = vpack.c.bf16 %v520, %v517
          %v567 = vpack.c.bf16 %v528, %v525
          %v568 = vpack.c.bf16 %v536, %v533
          %v569 = vpack.c.bf16 %v544, %v541
          %v570 = vpack.c.bf16 %v552, %v549
          %v587 = vunpack.c.l.b16 %v555
          %v588 = vunpack.c.h.b16 %v555
          %v589 = vunpack.c.l.b16 %v556
          %v590 = vunpack.c.h.b16 %v556
          %v591 = vunpack.c.l.b16 %v557
          %v592 = vunpack.c.h.b16 %v557
          %v593 = vunpack.c.l.b16 %v558
          %v594 = vunpack.c.h.b16 %v558
          %v595 = vunpack.c.l.b16 %v559
          %v596 = vunpack.c.h.b16 %v559
          %v597 = vunpack.c.l.b16 %v560
          %v598 = vunpack.c.h.b16 %v560
          %v599 = vunpack.c.l.b16 %v561
          %v600 = vunpack.c.h.b16 %v561
          %v601 = vunpack.c.l.b16 %v562
          %v602 = vunpack.c.h.b16 %v562
          %v603 = vunpack.c.l.b16 %v563
          %v604 = vunpack.c.h.b16 %v563
          %v605 = vunpack.c.l.b16 %v564
          %v606 = vunpack.c.h.b16 %v564
          %v607 = vunpack.c.l.b16 %v565
          %v608 = vunpack.c.h.b16 %v565
          %v609 = vunpack.c.l.b16 %v566
          %v610 = vunpack.c.h.b16 %v566
          %v611 = vunpack.c.l.b16 %v567
          %v612 = vunpack.c.h.b16 %v567
          %v613 = vunpack.c.l.b16 %v568
          %v614 = vunpack.c.h.b16 %v568
          %v615 = vunpack.c.l.b16 %v569
          %v616 = vunpack.c.h.b16 %v569
          %v617 = vunpack.c.l.b16 %v570
          %v618 = vunpack.c.h.b16 %v570
          %v619 = vpack.c.b16 %v587, %v587
          %v620 = vpack.c.b16 %v588, %v588
          %v621 = vpack.c.b16 %v589, %v589
          %v622 = vpack.c.b16 %v590, %v590
          %v623 = vpack.c.b16 %v591, %v591
          %v624 = vpack.c.b16 %v592, %v592
          %v625 = vpack.c.b16 %v593, %v593
          %v626 = vpack.c.b16 %v594, %v594
          %v627 = vpack.c.b16 %v595, %v595
          %v628 = vpack.c.b16 %v596, %v596
          %v629 = vpack.c.b16 %v597, %v597
          %v630 = vpack.c.b16 %v598, %v598
          %v631 = vpack.c.b16 %v599, %v599
          %v632 = vpack.c.b16 %v600, %v600
          %v633 = vpack.c.b16 %v601, %v601
          %v634 = vpack.c.b16 %v602, %v602
          %v635 = vpack.c.b16 %v603, %v603
          %v636 = vpack.c.b16 %v604, %v604
          %v637 = vpack.c.b16 %v605, %v605
          %v638 = vpack.c.b16 %v606, %v606
          %v639 = vpack.c.b16 %v607, %v607
          %v640 = vpack.c.b16 %v608, %v608
          %v641 = vpack.c.b16 %v609, %v609
          %v642 = vpack.c.b16 %v610, %v610
          %v643 = vpack.c.b16 %v611, %v611
          %v644 = vpack.c.b16 %v612, %v612
          %v645 = vpack.c.b16 %v613, %v613
          %v646 = vpack.c.b16 %v614, %v614
          %v647 = vpack.c.b16 %v615, %v615
          %v648 = vpack.c.b16 %v616, %v616
          %v649 = vpack.c.b16 %v617, %v617
          %v650 = vpack.c.b16 %v618, %v618
          %vm683 = vcmask 27648
          %684 = vst.msk [vmem:[#allocation2] sm:$0xf] %vm683, %v619
          %685 = vst.msk [vmem:[#allocation2 + $0x4] sm:$0xf] %vm683, %v620
          %686 = vst.msk [vmem:[#allocation2 + $0x8] sm:$0xf] %vm683, %v621
          %687 = vst.msk [vmem:[#allocation2 + $0xc] sm:$0xf] %vm683, %v622
          %688 = vst.msk [vmem:[#allocation2 + $0x10] sm:$0xf] %vm683, %v623
          %689 = vst.msk [vmem:[#allocation2 + $0x14] sm:$0xf] %vm683, %v624
          %690 = vst.msk [vmem:[#allocation2 + $0x18] sm:$0xf] %vm683, %v625
          %691 = vst.msk [vmem:[#allocation2 + $0x1c] sm:$0xf] %vm683, %v626
          %692 = vst.msk [vmem:[#allocation2 + $0x20] sm:$0xf] %vm683, %v627
          %693 = vst.msk [vmem:[#allocation2 + $0x24] sm:$0xf] %vm683, %v628
          %694 = vst.msk [vmem:[#allocation2 + $0x28] sm:$0xf] %vm683, %v629
          %695 = vst.msk [vmem:[#allocation2 + $0x2c] sm:$0xf] %vm683, %v630
          %696 = vst.msk [vmem:[#allocation2 + $0x30] sm:$0xf] %vm683, %v631
          %697 = vst.msk [vmem:[#allocation2 + $0x34] sm:$0xf] %vm683, %v632
          %698 = vst.msk [vmem:[#allocation2 + $0x38] sm:$0xf] %vm683, %v633
          %699 = vst.msk [vmem:[#allocation2 + $0x3c] sm:$0xf] %vm683, %v634
          %700 = vst.msk [vmem:[#allocation2 + $0x40] sm:$0xf] %vm683, %v635
          %701 = vst.msk [vmem:[#allocation2 + $0x44] sm:$0xf] %vm683, %v636
          %702 = vst.msk [vmem:[#allocation2 + $0x48] sm:$0xf] %vm683, %v637
          %703 = vst.msk [vmem:[#allocation2 + $0x4c] sm:$0xf] %vm683, %v638
          %704 = vst.msk [vmem:[#allocation2 + $0x50] sm:$0xf] %vm683, %v639
          %705 = vst.msk [vmem:[#allocation2 + $0x54] sm:$0xf] %vm683, %v640
          %706 = vst.msk [vmem:[#allocation2 + $0x58] sm:$0xf] %vm683, %v641
          %707 = vst.msk [vmem:[#allocation2 + $0x5c] sm:$0xf] %vm683, %v642
          %708 = vst.msk [vmem:[#allocation2 + $0x60] sm:$0xf] %vm683, %v643
          %709 = vst.msk [vmem:[#allocation2 + $0x64] sm:$0xf] %vm683, %v644
          %710 = vst.msk [vmem:[#allocation2 + $0x68] sm:$0xf] %vm683, %v645
          %711 = vst.msk [vmem:[#allocation2 + $0x6c] sm:$0xf] %vm683, %v646
          %712 = vst.msk [vmem:[#allocation2 + $0x70] sm:$0xf] %vm683, %v647
          %713 = vst.msk [vmem:[#allocation2 + $0x74] sm:$0xf] %vm683, %v648
          %714 = vst.msk [vmem:[#allocation2 + $0x78] sm:$0xf] %vm683, %v649
          %715 = vst.msk [vmem:[#allocation2 + $0x7c] sm:$0xf] %vm683, %v650
          %716 = vrot.lane.b32.xlu0 %v619, 124
          %v717 = vpop.permute.xlu0 %716
          %718 = vrot.lane.b32.xlu0 %v620, 124
          %v719 = vpop.permute.xlu0 %718
          %720 = vrot.lane.b32.xlu0 %v621, 124
          %v721 = vpop.permute.xlu0 %720
          %722 = vrot.lane.b32.xlu0 %v622, 124
          %v723 = vpop.permute.xlu0 %722
          %724 = vrot.lane.b32.xlu0 %v623, 124
          %v725 = vpop.permute.xlu0 %724
          %726 = vrot.lane.b32.xlu0 %v624, 124
          %v727 = vpop.permute.xlu0 %726
          %728 = vrot.lane.b32.xlu0 %v625, 124
          %v729 = vpop.permute.xlu0 %728
          %730 = vrot.lane.b32.xlu0 %v626, 124
          %v731 = vpop.permute.xlu0 %730
          %732 = vrot.lane.b32.xlu0 %v627, 124
          %v733 = vpop.permute.xlu0 %732
          %734 = vrot.lane.b32.xlu0 %v628, 124
          %v735 = vpop.permute.xlu0 %734
          %736 = vrot.lane.b32.xlu0 %v629, 124
          %v737 = vpop.permute.xlu0 %736
          %738 = vrot.lane.b32.xlu0 %v630, 124
          %v739 = vpop.permute.xlu0 %738
          %740 = vrot.lane.b32.xlu0 %v631, 124
          %v741 = vpop.permute.xlu0 %740
          %742 = vrot.lane.b32.xlu0 %v632, 124
          %v743 = vpop.permute.xlu0 %742
          %744 = vrot.lane.b32.xlu0 %v633, 124
          %v745 = vpop.permute.xlu0 %744
          %746 = vrot.lane.b32.xlu0 %v634, 124
          %v747 = vpop.permute.xlu0 %746
          %748 = vrot.lane.b32.xlu0 %v635, 124
          %v749 = vpop.permute.xlu0 %748
          %750 = vrot.lane.b32.xlu0 %v636, 124
          %v751 = vpop.permute.xlu0 %750
          %752 = vrot.lane.b32.xlu0 %v637, 124
          %v753 = vpop.permute.xlu0 %752
          %754 = vrot.lane.b32.xlu0 %v638, 124
          %v755 = vpop.permute.xlu0 %754
          %756 = vrot.lane.b32.xlu0 %v639, 124
          %v757 = vpop.permute.xlu0 %756
          %758 = vrot.lane.b32.xlu0 %v640, 124
          %v759 = vpop.permute.xlu0 %758
          %760 = vrot.lane.b32.xlu0 %v641, 124
          %v761 = vpop.permute.xlu0 %760
          %762 = vrot.lane.b32.xlu0 %v642, 124
          %v763 = vpop.permute.xlu0 %762
          %764 = vrot.lane.b32.xlu0 %v643, 124
          %v765 = vpop.permute.xlu0 %764
          %766 = vrot.lane.b32.xlu0 %v644, 124
          %v767 = vpop.permute.xlu0 %766
          %768 = vrot.lane.b32.xlu0 %v645, 124
          %v769 = vpop.permute.xlu0 %768
          %770 = vrot.lane.b32.xlu0 %v646, 124
          %v771 = vpop.permute.xlu0 %770
          %772 = vrot.lane.b32.xlu0 %v647, 124
          %v773 = vpop.permute.xlu0 %772
          %774 = vrot.lane.b32.xlu0 %v648, 124
          %v775 = vpop.permute.xlu0 %774
          %776 = vrot.lane.b32.xlu0 %v649, 124
          %v777 = vpop.permute.xlu0 %776
          %778 = vrot.lane.b32.xlu0 %v650, 124
          %v779 = vpop.permute.xlu0 %778
          %812 = vst.msk [vmem:[#allocation3] sm:$0xf] %vm683, %v717
          %813 = vst.msk [vmem:[#allocation3 + $0x4] sm:$0xf] %vm683, %v719
          %814 = vst.msk [vmem:[#allocation3 + $0x8] sm:$0xf] %vm683, %v721
          %815 = vst.msk [vmem:[#allocation3 + $0xc] sm:$0xf] %vm683, %v723
          %816 = vst.msk [vmem:[#allocation3 + $0x10] sm:$0xf] %vm683, %v725
          %817 = vst.msk [vmem:[#allocation3 + $0x14] sm:$0xf] %vm683, %v727
          %818 = vst.msk [vmem:[#allocation3 + $0x18] sm:$0xf] %vm683, %v729
          %819 = vst.msk [vmem:[#allocation3 + $0x1c] sm:$0xf] %vm683, %v731
          %820 = vst.msk [vmem:[#allocation3 + $0x20] sm:$0xf] %vm683, %v733
          %821 = vst.msk [vmem:[#allocation3 + $0x24] sm:$0xf] %vm683, %v735
          %822 = vst.msk [vmem:[#allocation3 + $0x28] sm:$0xf] %vm683, %v737
          %823 = vst.msk [vmem:[#allocation3 + $0x2c] sm:$0xf] %vm683, %v739
          %824 = vst.msk [vmem:[#allocation3 + $0x30] sm:$0xf] %vm683, %v741
          %825 = vst.msk [vmem:[#allocation3 + $0x34] sm:$0xf] %vm683, %v743
          %826 = vst.msk [vmem:[#allocation3 + $0x38] sm:$0xf] %vm683, %v745
          %827 = vst.msk [vmem:[#allocation3 + $0x3c] sm:$0xf] %vm683, %v747
          %828 = vst.msk [vmem:[#allocation3 + $0x40] sm:$0xf] %vm683, %v749
          %829 = vst.msk [vmem:[#allocation3 + $0x44] sm:$0xf] %vm683, %v751
          %830 = vst.msk [vmem:[#allocation3 + $0x48] sm:$0xf] %vm683, %v753
          %831 = vst.msk [vmem:[#allocation3 + $0x4c] sm:$0xf] %vm683, %v755
          %832 = vst.msk [vmem:[#allocation3 + $0x50] sm:$0xf] %vm683, %v757
          %833 = vst.msk [vmem:[#allocation3 + $0x54] sm:$0xf] %vm683, %v759
          %834 = vst.msk [vmem:[#allocation3 + $0x58] sm:$0xf] %vm683, %v761
          %835 = vst.msk [vmem:[#allocation3 + $0x5c] sm:$0xf] %vm683, %v763
          %836 = vst.msk [vmem:[#allocation3 + $0x60] sm:$0xf] %vm683, %v765
          %837 = vst.msk [vmem:[#allocation3 + $0x64] sm:$0xf] %vm683, %v767
          %838 = vst.msk [vmem:[#allocation3 + $0x68] sm:$0xf] %vm683, %v769
          %839 = vst.msk [vmem:[#allocation3 + $0x6c] sm:$0xf] %vm683, %v771
          %840 = vst.msk [vmem:[#allocation3 + $0x70] sm:$0xf] %vm683, %v773
          %841 = vst.msk [vmem:[#allocation3 + $0x74] sm:$0xf] %vm683, %v775
          %842 = vst.msk [vmem:[#allocation3 + $0x78] sm:$0xf] %vm683, %v777
          %843 = vst.msk [vmem:[#allocation3 + $0x7c] sm:$0xf] %vm683, %v779
          %844 = vrot.lane.b32.xlu0 %v619, 120
          %v845 = vpop.permute.xlu0 %844
          %846 = vrot.lane.b32.xlu0 %v620, 120
          %v847 = vpop.permute.xlu0 %846
          %848 = vrot.lane.b32.xlu0 %v621, 120
          %v849 = vpop.permute.xlu0 %848
          %850 = vrot.lane.b32.xlu0 %v622, 120
          %v851 = vpop.permute.xlu0 %850
          %852 = vrot.lane.b32.xlu0 %v623, 120
          %v853 = vpop.permute.xlu0 %852
          %854 = vrot.lane.b32.xlu0 %v624, 120
          %v855 = vpop.permute.xlu0 %854
          %856 = vrot.lane.b32.xlu0 %v625, 120
          %v857 = vpop.permute.xlu0 %856
          %858 = vrot.lane.b32.xlu0 %v626, 120
          %v859 = vpop.permute.xlu0 %858
          %860 = vrot.lane.b32.xlu0 %v627, 120
          %v861 = vpop.permute.xlu0 %860
          %862 = vrot.lane.b32.xlu0 %v628, 120
          %v863 = vpop.permute.xlu0 %862
          %864 = vrot.lane.b32.xlu0 %v629, 120
          %v865 = vpop.permute.xlu0 %864
          %866 = vrot.lane.b32.xlu0 %v630, 120
          %v867 = vpop.permute.xlu0 %866
          %868 = vrot.lane.b32.xlu0 %v631, 120
          %v869 = vpop.permute.xlu0 %868
          %870 = vrot.lane.b32.xlu0 %v632, 120
          %v871 = vpop.permute.xlu0 %870
          %872 = vrot.lane.b32.xlu0 %v633, 120
          %v873 = vpop.permute.xlu0 %872
          %874 = vrot.lane.b32.xlu0 %v634, 120
          %v875 = vpop.permute.xlu0 %874
          %876 = vrot.lane.b32.xlu0 %v635, 120
          %v877 = vpop.permute.xlu0 %876
          %878 = vrot.lane.b32.xlu0 %v636, 120
          %v879 = vpop.permute.xlu0 %878
          %880 = vrot.lane.b32.xlu0 %v637, 120
          %v881 = vpop.permute.xlu0 %880
          %882 = vrot.lane.b32.xlu0 %v638, 120
          %v883 = vpop.permute.xlu0 %882
          %884 = vrot.lane.b32.xlu0 %v639, 120
          %v885 = vpop.permute.xlu0 %884
          %886 = vrot.lane.b32.xlu0 %v640, 120
          %v887 = vpop.permute.xlu0 %886
          %888 = vrot.lane.b32.xlu0 %v641, 120
          %v889 = vpop.permute.xlu0 %888
          %890 = vrot.lane.b32.xlu0 %v642, 120
          %v891 = vpop.permute.xlu0 %890
          %892 = vrot.lane.b32.xlu0 %v643, 120
          %v893 = vpop.permute.xlu0 %892
          %894 = vrot.lane.b32.xlu0 %v644, 120
          %v895 = vpop.permute.xlu0 %894
          %896 = vrot.lane.b32.xlu0 %v645, 120
          %v897 = vpop.permute.xlu0 %896
          %898 = vrot.lane.b32.xlu0 %v646, 120
          %v899 = vpop.permute.xlu0 %898
          %900 = vrot.lane.b32.xlu0 %v647, 120
          %v901 = vpop.permute.xlu0 %900
          %902 = vrot.lane.b32.xlu0 %v648, 120
          %v903 = vpop.permute.xlu0 %902
          %904 = vrot.lane.b32.xlu0 %v649, 120
          %v905 = vpop.permute.xlu0 %904
          %906 = vrot.lane.b32.xlu0 %v650, 120
          %v907 = vpop.permute.xlu0 %906
          %vm940 = vcmask 257024
          %941 = vst.msk [vmem:[#allocation4] sm:$0xf] %vm940, %v845
          %942 = vst.msk [vmem:[#allocation4 + $0x4] sm:$0xf] %vm940, %v847
          %943 = vst.msk [vmem:[#allocation4 + $0x8] sm:$0xf] %vm940, %v849
          %944 = vst.msk [vmem:[#allocation4 + $0xc] sm:$0xf] %vm940, %v851
          %945 = vst.msk [vmem:[#allocation4 + $0x10] sm:$0xf] %vm940, %v853
          %946 = vst.msk [vmem:[#allocation4 + $0x14] sm:$0xf] %vm940, %v855
          %947 = vst.msk [vmem:[#allocation4 + $0x18] sm:$0xf] %vm940, %v857
          %948 = vst.msk [vmem:[#allocation4 + $0x1c] sm:$0xf] %vm940, %v859
          %949 = vst.msk [vmem:[#allocation4 + $0x20] sm:$0xf] %vm940, %v861
          %950 = vst.msk [vmem:[#allocation4 + $0x24] sm:$0xf] %vm940, %v863
          %951 = vst.msk [vmem:[#allocation4 + $0x28] sm:$0xf] %vm940, %v865
          %952 = vst.msk [vmem:[#allocation4 + $0x2c] sm:$0xf] %vm940, %v867
          %953 = vst.msk [vmem:[#allocation4 + $0x30] sm:$0xf] %vm940, %v869
          %954 = vst.msk [vmem:[#allocation4 + $0x34] sm:$0xf] %vm940, %v871
          %955 = vst.msk [vmem:[#allocation4 + $0x38] sm:$0xf] %vm940, %v873
          %956 = vst.msk [vmem:[#allocation4 + $0x3c] sm:$0xf] %vm940, %v875
          %957 = vst.msk [vmem:[#allocation4 + $0x40] sm:$0xf] %vm940, %v877
          %958 = vst.msk [vmem:[#allocation4 + $0x44] sm:$0xf] %vm940, %v879
          %959 = vst.msk [vmem:[#allocation4 + $0x48] sm:$0xf] %vm940, %v881
          %960 = vst.msk [vmem:[#allocation4 + $0x4c] sm:$0xf] %vm940, %v883
          %961 = vst.msk [vmem:[#allocation4 + $0x50] sm:$0xf] %vm940, %v885
          %962 = vst.msk [vmem:[#allocation4 + $0x54] sm:$0xf] %vm940, %v887
          %963 = vst.msk [vmem:[#allocation4 + $0x58] sm:$0xf] %vm940, %v889
          %964 = vst.msk [vmem:[#allocation4 + $0x5c] sm:$0xf] %vm940, %v891
          %965 = vst.msk [vmem:[#allocation4 + $0x60] sm:$0xf] %vm940, %v893
          %966 = vst.msk [vmem:[#allocation4 + $0x64] sm:$0xf] %vm940, %v895
          %967 = vst.msk [vmem:[#allocation4 + $0x68] sm:$0xf] %vm940, %v897
          %968 = vst.msk [vmem:[#allocation4 + $0x6c] sm:$0xf] %vm940, %v899
          %969 = vst.msk [vmem:[#allocation4 + $0x70] sm:$0xf] %vm940, %v901
          %970 = vst.msk [vmem:[#allocation4 + $0x74] sm:$0xf] %vm940, %v903
          %971 = vst.msk [vmem:[#allocation4 + $0x78] sm:$0xf] %vm940, %v905
          %972 = vst.msk [vmem:[#allocation4 + $0x7c] sm:$0xf] %vm940, %v907
          %973 = vst.msk [vmem:[%s261] sm:$0xff] %vm345, 0.0
          %974 = vst.msk [vmem:[%s261 + $0x8] sm:$0xff] %vm345, 0.0
          %975 = vst.msk [vmem:[%s261 + $0x10] sm:$0xff] %vm345, 0.0
          %976 = vst.msk [vmem:[%s261 + $0x18] sm:$0xff] %vm345, 0.0
          %977 = vst.msk [vmem:[%s261 + $0x20] sm:$0xff] %vm345, 0.0
          %978 = vst.msk [vmem:[%s261 + $0x28] sm:$0xff] %vm345, 0.0
          %979 = vst.msk [vmem:[%s261 + $0x30] sm:$0xff] %vm345, 0.0
          %980 = vst.msk [vmem:[%s261 + $0x38] sm:$0xff] %vm345, 0.0
          %981 = vst.msk [vmem:[%s261 + $0x40] sm:$0xff] %vm345, 0.0
          %982 = vst.msk [vmem:[%s261 + $0x48] sm:$0xff] %vm345, 0.0
          %983 = vst.msk [vmem:[%s261 + $0x50] sm:$0xff] %vm345, 0.0
          %984 = vst.msk [vmem:[%s261 + $0x58] sm:$0xff] %vm345, 0.0
          %985 = vst.msk [vmem:[%s261 + $0x60] sm:$0xff] %vm345, 0.0
          %986 = vst.msk [vmem:[%s261 + $0x68] sm:$0xff] %vm345, 0.0
          %987 = vst.msk [vmem:[%s261 + $0x70] sm:$0xff] %vm345, 0.0
          %988 = vst.msk [vmem:[%s261 + $0x78] sm:$0xff] %vm345, 0.0
          %989 = vst.msk [vmem:[%s261 + $0x80] sm:$0xff] %vm345, 0.0
          %990 = vst.msk [vmem:[%s261 + $0x88] sm:$0xff] %vm345, 0.0
          %991 = vst.msk [vmem:[%s261 + $0x90] sm:$0xff] %vm345, 0.0
          %992 = vst.msk [vmem:[%s261 + $0x98] sm:$0xff] %vm345, 0.0
          %993 = vst.msk [vmem:[%s261 + $0xa0] sm:$0xff] %vm345, 0.0
          %994 = vst.msk [vmem:[%s261 + $0xa8] sm:$0xff] %vm345, 0.0
          %995 = vst.msk [vmem:[%s261 + $0xb0] sm:$0xff] %vm345, 0.0
          %996 = vst.msk [vmem:[%s261 + $0xb8] sm:$0xff] %vm345, 0.0
          %997 = vst.msk [vmem:[%s261 + $0xc0] sm:$0xff] %vm345, 0.0
          %998 = vst.msk [vmem:[%s261 + $0xc8] sm:$0xff] %vm345, 0.0
          %999 = vst.msk [vmem:[%s261 + $0xd0] sm:$0xff] %vm345, 0.0
          %1000 = vst.msk [vmem:[%s261 + $0xd8] sm:$0xff] %vm345, 0.0
          %1001 = vst.msk [vmem:[%s261 + $0xe0] sm:$0xff] %vm345, 0.0
          %1002 = vst.msk [vmem:[%s261 + $0xe8] sm:$0xff] %vm345, 0.0
          %1003 = vst.msk [vmem:[%s261 + $0xf0] sm:$0xff] %vm345, 0.0
          %1004 = vst.msk [vmem:[%s261 + $0xf8] sm:$0xff] %vm345, 0.0
        $region44: #{self_attn_pallas.1} parent=35 // pred_fallthru
          _
        %s1005 = smul.u32 %s32, 128
        %v1006 = vld [vmem:[#allocation2] sm:$0xf]
        %v1007 = vld [vmem:[#allocation2 + $0x4] sm:$0xf]
        %v1008 = vld [vmem:[#allocation2 + $0x8] sm:$0xf]
        %v1009 = vld [vmem:[#allocation2 + $0xc] sm:$0xf]
        %v1010 = vld [vmem:[#allocation2 + $0x10] sm:$0xf]
        %v1011 = vld [vmem:[#allocation2 + $0x14] sm:$0xf]
        %v1012 = vld [vmem:[#allocation2 + $0x18] sm:$0xf]
        %v1013 = vld [vmem:[#allocation2 + $0x1c] sm:$0xf]
        %v1014 = vld [vmem:[#allocation2 + $0x20] sm:$0xf]
        %v1015 = vld [vmem:[#allocation2 + $0x24] sm:$0xf]
        %v1016 = vld [vmem:[#allocation2 + $0x28] sm:$0xf]
        %v1017 = vld [vmem:[#allocation2 + $0x2c] sm:$0xf]
        %v1018 = vld [vmem:[#allocation2 + $0x30] sm:$0xf]
        %v1019 = vld [vmem:[#allocation2 + $0x34] sm:$0xf]
        %v1020 = vld [vmem:[#allocation2 + $0x38] sm:$0xf]
        %v1021 = vld [vmem:[#allocation2 + $0x3c] sm:$0xf]
        %v1022 = vld [vmem:[#allocation2 + $0x40] sm:$0xf]
        %v1023 = vld [vmem:[#allocation2 + $0x44] sm:$0xf]
        %v1024 = vld [vmem:[#allocation2 + $0x48] sm:$0xf]
        %v1025 = vld [vmem:[#allocation2 + $0x4c] sm:$0xf]
        %v1026 = vld [vmem:[#allocation2 + $0x50] sm:$0xf]
        %v1027 = vld [vmem:[#allocation2 + $0x54] sm:$0xf]
        %v1028 = vld [vmem:[#allocation2 + $0x58] sm:$0xf]
        %v1029 = vld [vmem:[#allocation2 + $0x5c] sm:$0xf]
        %v1030 = vld [vmem:[#allocation2 + $0x60] sm:$0xf]
        %v1031 = vld [vmem:[#allocation2 + $0x64] sm:$0xf]
        %v1032 = vld [vmem:[#allocation2 + $0x68] sm:$0xf]
        %v1033 = vld [vmem:[#allocation2 + $0x6c] sm:$0xf]
        %v1034 = vld [vmem:[#allocation2 + $0x70] sm:$0xf]
        %v1035 = vld [vmem:[#allocation2 + $0x74] sm:$0xf]
        %v1036 = vld [vmem:[#allocation2 + $0x78] sm:$0xf]
        %v1037 = vld [vmem:[#allocation2 + $0x7c] sm:$0xf]
        %s1038 = sshra.s32 %s1005, 3
        %s1039 = sand.u32 %s1005, 7
        %s1040 = smul.addr %s1038, 4
        %s1041 = scalar_lea.vmem [#allocation3], %s1040
        %v1042 = vld [vmem:[%s1041] sm:$0xf]
        %v1043 = vld [vmem:[%s1041 + $0x4] sm:$0xf]
        %v1044 = vld [vmem:[%s1041 + $0x8] sm:$0xf]
        %v1045 = vld [vmem:[%s1041 + $0xc] sm:$0xf]
        %v1046 = vld [vmem:[%s1041 + $0x10] sm:$0xf]
        %v1047 = vld [vmem:[%s1041 + $0x14] sm:$0xf]
        %v1048 = vld [vmem:[%s1041 + $0x18] sm:$0xf]
        %v1049 = vld [vmem:[%s1041 + $0x1c] sm:$0xf]
        %v1050 = vld [vmem:[%s1041 + $0x20] sm:$0xf]
        %v1051 = vld [vmem:[%s1041 + $0x24] sm:$0xf]
        %v1052 = vld [vmem:[%s1041 + $0x28] sm:$0xf]
        %v1053 = vld [vmem:[%s1041 + $0x2c] sm:$0xf]
        %v1054 = vld [vmem:[%s1041 + $0x30] sm:$0xf]
        %v1055 = vld [vmem:[%s1041 + $0x34] sm:$0xf]
        %v1056 = vld [vmem:[%s1041 + $0x38] sm:$0xf]
        %v1057 = vld [vmem:[%s1041 + $0x3c] sm:$0xf]
        %s1058 = smul.addr %s1038, 4
        %s1059 = scalar_lea.vmem [#allocation4], %s1058
        %v1060 = vld [vmem:[%s1059] sm:$0xf]
        %v1061 = vld [vmem:[%s1059 + $0x4] sm:$0xf]
        %v1062 = vld [vmem:[%s1059 + $0x8] sm:$0xf]
        %v1063 = vld [vmem:[%s1059 + $0xc] sm:$0xf]
        %v1064 = vld [vmem:[%s1059 + $0x10] sm:$0xf]
        %v1065 = vld [vmem:[%s1059 + $0x14] sm:$0xf]
        %v1066 = vld [vmem:[%s1059 + $0x18] sm:$0xf]
        %v1067 = vld [vmem:[%s1059 + $0x1c] sm:$0xf]
        %v1068 = vld [vmem:[%s1059 + $0x20] sm:$0xf]
        %v1069 = vld [vmem:[%s1059 + $0x24] sm:$0xf]
        %v1070 = vld [vmem:[%s1059 + $0x28] sm:$0xf]
        %v1071 = vld [vmem:[%s1059 + $0x2c] sm:$0xf]
        %v1072 = vld [vmem:[%s1059 + $0x30] sm:$0xf]
        %v1073 = vld [vmem:[%s1059 + $0x34] sm:$0xf]
        %v1074 = vld [vmem:[%s1059 + $0x38] sm:$0xf]
        %v1075 = vld [vmem:[%s1059 + $0x3c] sm:$0xf]
        %v1108 = vunpack.c.l.b16 %v1006
        %v1109 = vunpack.c.l.b16 %v1007
        %v1110 = vunpack.c.l.b16 %v1008
        %v1111 = vunpack.c.l.b16 %v1009
        %v1112 = vunpack.c.l.b16 %v1010
        %v1113 = vunpack.c.l.b16 %v1011
        %v1114 = vunpack.c.l.b16 %v1012
        %v1115 = vunpack.c.l.b16 %v1013
        %v1116 = vunpack.c.l.b16 %v1014
        %v1117 = vunpack.c.l.b16 %v1015
        %v1118 = vunpack.c.l.b16 %v1016
        %v1119 = vunpack.c.l.b16 %v1017
        %v1120 = vunpack.c.l.b16 %v1018
        %v1121 = vunpack.c.l.b16 %v1019
        %v1122 = vunpack.c.l.b16 %v1020
        %v1123 = vunpack.c.l.b16 %v1021
        %v1124 = vunpack.c.l.b16 %v1022
        %v1125 = vunpack.c.l.b16 %v1023
        %v1126 = vunpack.c.l.b16 %v1024
        %v1127 = vunpack.c.l.b16 %v1025
        %v1128 = vunpack.c.l.b16 %v1026
        %v1129 = vunpack.c.l.b16 %v1027
        %v1130 = vunpack.c.l.b16 %v1028
        %v1131 = vunpack.c.l.b16 %v1029
        %v1132 = vunpack.c.l.b16 %v1030
        %v1133 = vunpack.c.l.b16 %v1031
        %v1134 = vunpack.c.l.b16 %v1032
        %v1135 = vunpack.c.l.b16 %v1033
        %v1136 = vunpack.c.l.b16 %v1034
        %v1137 = vunpack.c.l.b16 %v1035
        %v1138 = vunpack.c.l.b16 %v1036
        %v1139 = vunpack.c.l.b16 %v1037
        %v1140 = vpack.c.b16 %v1109, %v1108
        %v1141 = vpack.c.b16 %v1111, %v1110
        %v1142 = vpack.c.b16 %v1113, %v1112
        %v1143 = vpack.c.b16 %v1115, %v1114
        %v1144 = vpack.c.b16 %v1117, %v1116
        %v1145 = vpack.c.b16 %v1119, %v1118
        %v1146 = vpack.c.b16 %v1121, %v1120
        %v1147 = vpack.c.b16 %v1123, %v1122
        %v1148 = vpack.c.b16 %v1125, %v1124
        %v1149 = vpack.c.b16 %v1127, %v1126
        %v1150 = vpack.c.b16 %v1129, %v1128
        %v1151 = vpack.c.b16 %v1131, %v1130
        %v1152 = vpack.c.b16 %v1133, %v1132
        %v1153 = vpack.c.b16 %v1135, %v1134
        %v1154 = vpack.c.b16 %v1137, %v1136
        %v1155 = vpack.c.b16 %v1139, %v1138
        %v1172 = vunpack.c.l.b16 %v1042
        %v1173 = vunpack.c.l.b16 %v1043
        %v1174 = vunpack.c.l.b16 %v1044
        %v1175 = vunpack.c.l.b16 %v1045
        %v1176 = vunpack.c.l.b16 %v1046
        %v1177 = vunpack.c.l.b16 %v1047
        %v1178 = vunpack.c.l.b16 %v1048
        %v1179 = vunpack.c.l.b16 %v1049
        %v1180 = vunpack.c.l.b16 %v1050
        %v1181 = vunpack.c.l.b16 %v1051
        %v1182 = vunpack.c.l.b16 %v1052
        %v1183 = vunpack.c.l.b16 %v1053
        %v1184 = vunpack.c.l.b16 %v1054
        %v1185 = vunpack.c.l.b16 %v1055
        %v1186 = vunpack.c.l.b16 %v1056
        %v1187 = vunpack.c.l.b16 %v1057
        %v1188 = vpack.c.b16 %v1173, %v1172
        %v1189 = vpack.c.b16 %v1175, %v1174
        %v1190 = vpack.c.b16 %v1177, %v1176
        %v1191 = vpack.c.b16 %v1179, %v1178
        %v1192 = vpack.c.b16 %v1181, %v1180
        %v1193 = vpack.c.b16 %v1183, %v1182
        %v1194 = vpack.c.b16 %v1185, %v1184
        %v1195 = vpack.c.b16 %v1187, %v1186
        %vm1196 = vcmask 31744
        %v1198 = vsel %vm1196, %v1140, 0
        %v1201 = vsel %vm1196, %v1141, 0
        %v1204 = vsel %vm1196, %v1142, 0
        %v1207 = vsel %vm1196, %v1143, 0
        %v1210 = vsel %vm1196, %v1144, 0
        %v1213 = vsel %vm1196, %v1145, 0
        %v1216 = vsel %vm1196, %v1146, 0
        %v1219 = vsel %vm1196, %v1147, 0
        %v1222 = vsel %vm1196, %v1148, 0
        %v1225 = vsel %vm1196, %v1149, 0
        %v1228 = vsel %vm1196, %v1150, 0
        %v1231 = vsel %vm1196, %v1151, 0
        %v1234 = vsel %vm1196, %v1152, 0
        %v1237 = vsel %vm1196, %v1153, 0
        %v1240 = vsel %vm1196, %v1154, 0
        %v1243 = vsel %vm1196, %v1155, 0
        %v1246 = vsel %vm1196, %v1188, 0
        %v1249 = vsel %vm1196, %v1189, 0
        %v1252 = vsel %vm1196, %v1190, 0
        %v1255 = vsel %vm1196, %v1191, 0
        %v1258 = vsel %vm1196, %v1192, 0
        %v1261 = vsel %vm1196, %v1193, 0
        %v1264 = vsel %vm1196, %v1194, 0
        %v1267 = vsel %vm1196, %v1195, 0
        %1269 = vmatprep.subr.bf16.mxu0 0
        %1270 = vmatpush1.bf16.xpose.msra.mxu0 %v1267
        %1271 = vmatprep.subr.bf16.mxu0 0
        %1272 = vmatpush1.bf16.xpose.msra.mxu0 %v1264
        %1273 = vmatprep.subr.bf16.mxu0 0
        %1274 = vmatpush1.bf16.xpose.msra.mxu0 %v1261
        %1275 = vmatprep.subr.bf16.mxu0 0
        %1276 = vmatpush1.bf16.xpose.msra.mxu0 %v1258
        %1277 = vmatprep.subr.bf16.mxu0 0
        %1278 = vmatpush1.bf16.xpose.msra.mxu0 %v1255
        %1279 = vmatprep.subr.bf16.mxu0 0
        %1280 = vmatpush1.bf16.xpose.msra.mxu0 %v1252
        %1281 = vmatprep.subr.bf16.mxu0 0
        %1282 = vmatpush1.bf16.xpose.msra.mxu0 %v1249
        %1283 = vmatprep.subr.bf16.mxu0 0
        %1284 = vmatpush1.bf16.xpose.msra.mxu0 %v1246
        %1285 = vmatprep.subr.bf16.mxu0 0
        %1286 = vmatpush2.bf16.xpose.msra.mxu0 0
        %1287 = vmatprep.subr.bf16.mxu0 0
        %1288 = vmatpush2.bf16.xpose.msra.mxu0 0
        %1289 = vmatprep.subr.bf16.mxu0 0
        %1290 = vmatpush2.bf16.xpose.msra.mxu0 0
        %1291 = vmatprep.subr.bf16.mxu0 0
        %1292 = vmatpush2.bf16.xpose.msra.mxu0 0
        %1293 = vmatprep.subr.bf16.mxu0 0
        %1294 = vmatpush2.bf16.xpose.msra.mxu0 0
        %1295 = vmatprep.subr.bf16.mxu0 0
        %1296 = vmatpush2.bf16.xpose.msra.mxu0 0
        %1297 = vmatprep.subr.bf16.mxu0 0
        %1298 = vmatpush2.bf16.xpose.msra.mxu0 0
        %1299 = vmatprep.subr.bf16.mxu0 0
        %1300 = vmatpush2.bf16.xpose.msra.mxu0 0
        %1301 = vmatprep.mubr.bf16.mxu0 0
        %1302 = vmatmul.mubr.bf16.gmra.mxu0 %v1198
        %v1303 = vpop.f32.mrf.mxu0
        %v1304 = vadd.f32 0.0, %v1303
        %v1305 = vpop.f32.mrf.mxu0
        %v1306 = vpop.f32.mrf.mxu0
        %v1307 = vadd.f32 0.0, %v1306
        %v1308 = vpop.f32.mrf.mxu0
        %1309 = vmatprep.mubr.bf16.mxu0 0
        %1310 = vmatmul.mubr.bf16.gmra.mxu0 %v1201
        %v1311 = vpop.f32.mrf.mxu0
        %v1312 = vadd.f32 0.0, %v1311
        %v1313 = vpop.f32.mrf.mxu0
        %v1314 = vpop.f32.mrf.mxu0
        %v1315 = vadd.f32 0.0, %v1314
        %v1316 = vpop.f32.mrf.mxu0
        %1317 = vmatprep.mubr.bf16.mxu0 0
        %1318 = vmatmul.mubr.bf16.gmra.mxu0 %v1204
        %v1319 = vpop.f32.mrf.mxu0
        %v1320 = vadd.f32 0.0, %v1319
        %v1321 = vpop.f32.mrf.mxu0
        %v1322 = vpop.f32.mrf.mxu0
        %v1323 = vadd.f32 0.0, %v1322
        %v1324 = vpop.f32.mrf.mxu0
        %1325 = vmatprep.mubr.bf16.mxu0 0
        %1326 = vmatmul.mubr.bf16.gmra.mxu0 %v1207
        %v1327 = vpop.f32.mrf.mxu0
        %v1328 = vadd.f32 0.0, %v1327
        %v1329 = vpop.f32.mrf.mxu0
        %v1330 = vpop.f32.mrf.mxu0
        %v1331 = vadd.f32 0.0, %v1330
        %v1332 = vpop.f32.mrf.mxu0
        %1333 = vmatprep.mubr.bf16.mxu0 0
        %1334 = vmatmul.mubr.bf16.gmra.mxu0 %v1210
        %v1335 = vpop.f32.mrf.mxu0
        %v1336 = vadd.f32 0.0, %v1335
        %v1337 = vpop.f32.mrf.mxu0
        %v1338 = vpop.f32.mrf.mxu0
        %v1339 = vadd.f32 0.0, %v1338
        %v1340 = vpop.f32.mrf.mxu0
        %1341 = vmatprep.mubr.bf16.mxu0 0
        %1342 = vmatmul.mubr.bf16.gmra.mxu0 %v1213
        %v1343 = vpop.f32.mrf.mxu0
        %v1344 = vadd.f32 0.0, %v1343
        %v1345 = vpop.f32.mrf.mxu0
        %v1346 = vpop.f32.mrf.mxu0
        %v1347 = vadd.f32 0.0, %v1346
        %v1348 = vpop.f32.mrf.mxu0
        %1349 = vmatprep.mubr.bf16.mxu0 0
        %1350 = vmatmul.mubr.bf16.gmra.mxu0 %v1216
        %v1351 = vpop.f32.mrf.mxu0
        %v1352 = vadd.f32 0.0, %v1351
        %v1353 = vpop.f32.mrf.mxu0
        %v1354 = vpop.f32.mrf.mxu0
        %v1355 = vadd.f32 0.0, %v1354
        %v1356 = vpop.f32.mrf.mxu0
        %1357 = vmatprep.mubr.bf16.mxu0 0
        %1358 = vmatmul.mubr.bf16.gmra.mxu0 %v1219
        %v1359 = vpop.f32.mrf.mxu0
        %v1360 = vadd.f32 0.0, %v1359
        %v1361 = vpop.f32.mrf.mxu0
        %v1362 = vpop.f32.mrf.mxu0
        %v1363 = vadd.f32 0.0, %v1362
        %v1364 = vpop.f32.mrf.mxu0
        %1365 = vmatprep.mubr.bf16.mxu0 0
        %1366 = vmatmul.mubr.bf16.gmra.mxu0 %v1222
        %v1367 = vpop.f32.mrf.mxu0
        %v1368 = vadd.f32 0.0, %v1367
        %v1369 = vpop.f32.mrf.mxu0
        %v1370 = vpop.f32.mrf.mxu0
        %v1371 = vadd.f32 0.0, %v1370
        %v1372 = vpop.f32.mrf.mxu0
        %1373 = vmatprep.mubr.bf16.mxu0 0
        %1374 = vmatmul.mubr.bf16.gmra.mxu0 %v1225
        %v1375 = vpop.f32.mrf.mxu0
        %v1376 = vadd.f32 0.0, %v1375
        %v1377 = vpop.f32.mrf.mxu0
        %v1378 = vpop.f32.mrf.mxu0
        %v1379 = vadd.f32 0.0, %v1378
        %v1380 = vpop.f32.mrf.mxu0
        %1381 = vmatprep.mubr.bf16.mxu0 0
        %1382 = vmatmul.mubr.bf16.gmra.mxu0 %v1228
        %v1383 = vpop.f32.mrf.mxu0
        %v1384 = vadd.f32 0.0, %v1383
        %v1385 = vpop.f32.mrf.mxu0
        %v1386 = vpop.f32.mrf.mxu0
        %v1387 = vadd.f32 0.0, %v1386
        %v1388 = vpop.f32.mrf.mxu0
        %1389 = vmatprep.mubr.bf16.mxu0 0
        %1390 = vmatmul.mubr.bf16.gmra.mxu0 %v1231
        %v1391 = vpop.f32.mrf.mxu0
        %v1392 = vadd.f32 0.0, %v1391
        %v1393 = vpop.f32.mrf.mxu0
        %v1394 = vpop.f32.mrf.mxu0
        %v1395 = vadd.f32 0.0, %v1394
        %v1396 = vpop.f32.mrf.mxu0
        %1397 = vmatprep.mubr.bf16.mxu0 0
        %1398 = vmatmul.mubr.bf16.gmra.mxu0 %v1234
        %v1399 = vpop.f32.mrf.mxu0
        %v1400 = vadd.f32 0.0, %v1399
        %v1401 = vpop.f32.mrf.mxu0
        %v1402 = vpop.f32.mrf.mxu0
        %v1403 = vadd.f32 0.0, %v1402
        %v1404 = vpop.f32.mrf.mxu0
        %1405 = vmatprep.mubr.bf16.mxu0 0
        %1406 = vmatmul.mubr.bf16.gmra.mxu0 %v1237
        %v1407 = vpop.f32.mrf.mxu0
        %v1408 = vadd.f32 0.0, %v1407
        %v1409 = vpop.f32.mrf.mxu0
        %v1410 = vpop.f32.mrf.mxu0
        %v1411 = vadd.f32 0.0, %v1410
        %v1412 = vpop.f32.mrf.mxu0
        %1413 = vmatprep.mubr.bf16.mxu0 0
        %1414 = vmatmul.mubr.bf16.gmra.mxu0 %v1240
        %v1415 = vpop.f32.mrf.mxu0
        %v1416 = vadd.f32 0.0, %v1415
        %v1417 = vpop.f32.mrf.mxu0
        %v1418 = vpop.f32.mrf.mxu0
        %v1419 = vadd.f32 0.0, %v1418
        %v1420 = vpop.f32.mrf.mxu0
        %1421 = vmatprep.mubr.bf16.mxu0 0
        %1422 = vmatmul.mubr.bf16.gmra.mxu0 %v1243
        %v1423 = vpop.f32.mrf.mxu0
        %v1424 = vadd.f32 0.0, %v1423
        %v1425 = vpop.f32.mrf.mxu0
        %v1426 = vpop.f32.mrf.mxu0
        %v1427 = vadd.f32 0.0, %v1426
        %v1428 = vpop.f32.mrf.mxu0
        %1429 = vdwg.mxu0
        %v1430 = vmax.f32 %v1304, %v1320
        %v1431 = vmax.f32 %v1307, %v1323
        %v1432 = vmax.f32 %v1312, %v1328
        %v1433 = vmax.f32 %v1315, %v1331
        %v1434 = vmax.f32 %v1430, %v1336
        %v1435 = vmax.f32 %v1431, %v1339
        %v1436 = vmax.f32 %v1432, %v1344
        %v1437 = vmax.f32 %v1433, %v1347
        %v1438 = vmax.f32 %v1434, %v1352
        %v1439 = vmax.f32 %v1435, %v1355
        %v1440 = vmax.f32 %v1436, %v1360
        %v1441 = vmax.f32 %v1437, %v1363
        %v1442 = vmax.f32 %v1438, %v1368
        %v1443 = vmax.f32 %v1439, %v1371
        %v1444 = vmax.f32 %v1440, %v1376
        %v1445 = vmax.f32 %v1441, %v1379
        %v1446 = vmax.f32 %v1442, %v1384
        %v1447 = vmax.f32 %v1443, %v1387
        %v1448 = vmax.f32 %v1444, %v1392
        %v1449 = vmax.f32 %v1445, %v1395
        %v1450 = vmax.f32 %v1446, %v1400
        %v1451 = vmax.f32 %v1447, %v1403
        %v1452 = vmax.f32 %v1448, %v1408
        %v1453 = vmax.f32 %v1449, %v1411
        %v1454 = vmax.f32 %v1450, %v1416
        %v1455 = vmax.f32 %v1451, %v1419
        %v1456 = vmax.f32 %v1452, %v1424
        %v1457 = vmax.f32 %v1453, %v1427
        %v1458 = vmax.f32 %v1454, %v1455
        %v1459 = vmax.f32 %v1456, %v1457
        %v1460 = vmax.f32 %v1458, %v1459
        %v1461 = vrot.slane %v1460, 4
        %v1462 = vmax.f32 %v1460, %v1461
        %v1463 = vrot.slane %v1462, 2
        %v1464 = vmax.f32 %v1462, %v1463
        %v1465 = vrot.slane %v1464, 1
        %v1466 = vmax.f32 %v1464, %v1465
        %v1467 = vsub.f32 %v1304, %v1466
        %v1468 = vsub.f32 %v1307, %v1466
        %v1469 = vsub.f32 %v1312, %v1466
        %v1470 = vsub.f32 %v1315, %v1466
        %v1471 = vsub.f32 %v1320, %v1466
        %v1472 = vsub.f32 %v1323, %v1466
        %v1473 = vsub.f32 %v1328, %v1466
        %v1474 = vsub.f32 %v1331, %v1466
        %v1475 = vsub.f32 %v1336, %v1466
        %v1476 = vsub.f32 %v1339, %v1466
        %v1477 = vsub.f32 %v1344, %v1466
        %v1478 = vsub.f32 %v1347, %v1466
        %v1479 = vsub.f32 %v1352, %v1466
        %v1480 = vsub.f32 %v1355, %v1466
        %v1481 = vsub.f32 %v1360, %v1466
        %v1482 = vsub.f32 %v1363, %v1466
        %v1483 = vsub.f32 %v1368, %v1466
        %v1484 = vsub.f32 %v1371, %v1466
        %v1485 = vsub.f32 %v1376, %v1466
        %v1486 = vsub.f32 %v1379, %v1466
        %v1487 = vsub.f32 %v1384, %v1466
        %v1488 = vsub.f32 %v1387, %v1466
        %v1489 = vsub.f32 %v1392, %v1466
        %v1490 = vsub.f32 %v1395, %v1466
        %v1491 = vsub.f32 %v1400, %v1466
        %v1492 = vsub.f32 %v1403, %v1466
        %v1493 = vsub.f32 %v1408, %v1466
        %v1494 = vsub.f32 %v1411, %v1466
        %v1495 = vsub.f32 %v1416, %v1466
        %v1496 = vsub.f32 %v1419, %v1466
        %v1497 = vsub.f32 %v1424, %v1466
        %v1498 = vsub.f32 %v1427, %v1466
        %v1499 = vmul.f32 %v1467, 1.442695
        %v1500 = vpow.pop %v1499
        %v1501 = vmul.f32 %v1468, 1.442695
        %v1502 = vpow.pop %v1501
        %v1503 = vmul.f32 %v1469, 1.442695
        %v1504 = vpow.pop %v1503
        %v1505 = vmul.f32 %v1470, 1.442695
        %v1506 = vpow.pop %v1505
        %v1507 = vmul.f32 %v1471, 1.442695
        %v1508 = vpow.pop %v1507
        %v1509 = vmul.f32 %v1472, 1.442695
        %v1510 = vpow.pop %v1509
        %v1511 = vmul.f32 %v1473, 1.442695
        %v1512 = vpow.pop %v1511
        %v1513 = vmul.f32 %v1474, 1.442695
        %v1514 = vpow.pop %v1513
        %v1515 = vmul.f32 %v1475, 1.442695
        %v1516 = vpow.pop %v1515
        %v1517 = vmul.f32 %v1476, 1.442695
        %v1518 = vpow.pop %v1517
        %v1519 = vmul.f32 %v1477, 1.442695
        %v1520 = vpow.pop %v1519
        %v1521 = vmul.f32 %v1478, 1.442695
        %v1522 = vpow.pop %v1521
        %v1523 = vmul.f32 %v1479, 1.442695
        %v1524 = vpow.pop %v1523
        %v1525 = vmul.f32 %v1480, 1.442695
        %v1526 = vpow.pop %v1525
        %v1527 = vmul.f32 %v1481, 1.442695
        %v1528 = vpow.pop %v1527
        %v1529 = vmul.f32 %v1482, 1.442695
        %v1530 = vpow.pop %v1529
        %v1531 = vmul.f32 %v1483, 1.442695
        %v1532 = vpow.pop %v1531
        %v1533 = vmul.f32 %v1484, 1.442695
        %v1534 = vpow.pop %v1533
        %v1535 = vmul.f32 %v1485, 1.442695
        %v1536 = vpow.pop %v1535
        %v1537 = vmul.f32 %v1486, 1.442695
        %v1538 = vpow.pop %v1537
        %v1539 = vmul.f32 %v1487, 1.442695
        %v1540 = vpow.pop %v1539
        %v1541 = vmul.f32 %v1488, 1.442695
        %v1542 = vpow.pop %v1541
        %v1543 = vmul.f32 %v1489, 1.442695
        %v1544 = vpow.pop %v1543
        %v1545 = vmul.f32 %v1490, 1.442695
        %v1546 = vpow.pop %v1545
        %v1547 = vmul.f32 %v1491, 1.442695
        %v1548 = vpow.pop %v1547
        %v1549 = vmul.f32 %v1492, 1.442695
        %v1550 = vpow.pop %v1549
        %v1551 = vmul.f32 %v1493, 1.442695
        %v1552 = vpow.pop %v1551
        %v1553 = vmul.f32 %v1494, 1.442695
        %v1554 = vpow.pop %v1553
        %v1555 = vmul.f32 %v1495, 1.442695
        %v1556 = vpow.pop %v1555
        %v1557 = vmul.f32 %v1496, 1.442695
        %v1558 = vpow.pop %v1557
        %v1559 = vmul.f32 %v1497, 1.442695
        %v1560 = vpow.pop %v1559
        %v1561 = vmul.f32 %v1498, 1.442695
        %v1562 = vpow.pop %v1561
        %v1563 = vadd.f32 %v1500, %v1502
        %v1564 = vadd.f32 %v1563, %v1504
        %v1565 = vadd.f32 %v1564, %v1506
        %v1566 = vadd.f32 %v1565, %v1508
        %v1567 = vadd.f32 %v1566, %v1510
        %v1568 = vadd.f32 %v1567, %v1512
        %v1569 = vadd.f32 %v1568, %v1514
        %v1570 = vadd.f32 %v1569, %v1516
        %v1571 = vadd.f32 %v1570, %v1518
        %v1572 = vadd.f32 %v1571, %v1520
        %v1573 = vadd.f32 %v1572, %v1522
        %v1574 = vadd.f32 %v1573, %v1524
        %v1575 = vadd.f32 %v1574, %v1526
        %v1576 = vadd.f32 %v1575, %v1528
        %v1577 = vadd.f32 %v1576, %v1530
        %v1578 = vadd.f32 %v1577, %v1532
        %v1579 = vadd.f32 %v1578, %v1534
        %v1580 = vadd.f32 %v1579, %v1536
        %v1581 = vadd.f32 %v1580, %v1538
        %v1582 = vadd.f32 %v1581, %v1540
        %v1583 = vadd.f32 %v1582, %v1542
        %v1584 = vadd.f32 %v1583, %v1544
        %v1585 = vadd.f32 %v1584, %v1546
        %v1586 = vadd.f32 %v1585, %v1548
        %v1587 = vadd.f32 %v1586, %v1550
        %v1588 = vadd.f32 %v1587, %v1552
        %v1589 = vadd.f32 %v1588, %v1554
        %v1590 = vadd.f32 %v1589, %v1556
        %v1591 = vadd.f32 %v1590, %v1558
        %v1592 = vadd.f32 %v1591, %v1560
        %v1593 = vadd.f32 %v1592, %v1562
        %v1594 = vrot.slane %v1593, 4
        %v1595 = vadd.f32 %v1593, %v1594
        %v1596 = vrot.slane %v1595, 2
        %v1597 = vadd.f32 %v1595, %v1596
        %v1598 = vrot.slane %v1597, 1
        %v1599 = vadd.f32 %v1597, %v1598
        %v1600 = vrcp.pop %v1599
        %v1601 = vmul.f32 %v1500, %v1600
        %v1602 = vmul.f32 %v1502, %v1600
        %v1603 = vmul.f32 %v1504, %v1600
        %v1604 = vmul.f32 %v1506, %v1600
        %v1605 = vmul.f32 %v1508, %v1600
        %v1606 = vmul.f32 %v1510, %v1600
        %v1607 = vmul.f32 %v1512, %v1600
        %v1608 = vmul.f32 %v1514, %v1600
        %v1609 = vmul.f32 %v1516, %v1600
        %v1610 = vmul.f32 %v1518, %v1600
        %v1611 = vmul.f32 %v1520, %v1600
        %v1612 = vmul.f32 %v1522, %v1600
        %v1613 = vmul.f32 %v1524, %v1600
        %v1614 = vmul.f32 %v1526, %v1600
        %v1615 = vmul.f32 %v1528, %v1600
        %v1616 = vmul.f32 %v1530, %v1600
        %v1617 = vmul.f32 %v1532, %v1600
        %v1618 = vmul.f32 %v1534, %v1600
        %v1619 = vmul.f32 %v1536, %v1600
        %v1620 = vmul.f32 %v1538, %v1600
        %v1621 = vmul.f32 %v1540, %v1600
        %v1622 = vmul.f32 %v1542, %v1600
        %v1623 = vmul.f32 %v1544, %v1600
        %v1624 = vmul.f32 %v1546, %v1600
        %v1625 = vmul.f32 %v1548, %v1600
        %v1626 = vmul.f32 %v1550, %v1600
        %v1627 = vmul.f32 %v1552, %v1600
        %v1628 = vmul.f32 %v1554, %v1600
        %v1629 = vmul.f32 %v1556, %v1600
        %v1630 = vmul.f32 %v1558, %v1600
        %v1631 = vmul.f32 %v1560, %v1600
        %v1632 = vmul.f32 %v1562, %v1600
        %v1633 = vpack.c.bf16 %v1602, %v1601
        %v1634 = vpack.c.bf16 %v1604, %v1603
        %v1635 = vpack.c.bf16 %v1606, %v1605
        %v1636 = vpack.c.bf16 %v1608, %v1607
        %v1637 = vpack.c.bf16 %v1610, %v1609
        %v1638 = vpack.c.bf16 %v1612, %v1611
        %v1639 = vpack.c.bf16 %v1614, %v1613
        %v1640 = vpack.c.bf16 %v1616, %v1615
        %v1641 = vpack.c.bf16 %v1618, %v1617
        %v1642 = vpack.c.bf16 %v1620, %v1619
        %v1643 = vpack.c.bf16 %v1622, %v1621
        %v1644 = vpack.c.bf16 %v1624, %v1623
        %v1645 = vpack.c.bf16 %v1626, %v1625
        %v1646 = vpack.c.bf16 %v1628, %v1627
        %v1647 = vpack.c.bf16 %v1630, %v1629
        %v1648 = vpack.c.bf16 %v1632, %v1631
        %v1665 = vunpack.c.l.b16 %v1633
        %v1666 = vunpack.c.h.b16 %v1633
        %v1667 = vunpack.c.l.b16 %v1634
        %v1668 = vunpack.c.h.b16 %v1634
        %v1669 = vunpack.c.l.b16 %v1635
        %v1670 = vunpack.c.h.b16 %v1635
        %v1671 = vunpack.c.l.b16 %v1636
        %v1672 = vunpack.c.h.b16 %v1636
        %v1673 = vunpack.c.l.b16 %v1637
        %v1674 = vunpack.c.h.b16 %v1637
        %v1675 = vunpack.c.l.b16 %v1638
        %v1676 = vunpack.c.h.b16 %v1638
        %v1677 = vunpack.c.l.b16 %v1639
        %v1678 = vunpack.c.h.b16 %v1639
        %v1679 = vunpack.c.l.b16 %v1640
        %v1680 = vunpack.c.h.b16 %v1640
        %v1681 = vunpack.c.l.b16 %v1641
        %v1682 = vunpack.c.h.b16 %v1641
        %v1683 = vunpack.c.l.b16 %v1642
        %v1684 = vunpack.c.h.b16 %v1642
        %v1685 = vunpack.c.l.b16 %v1643
        %v1686 = vunpack.c.h.b16 %v1643
        %v1687 = vunpack.c.l.b16 %v1644
        %v1688 = vunpack.c.h.b16 %v1644
        %v1689 = vunpack.c.l.b16 %v1645
        %v1690 = vunpack.c.h.b16 %v1645
        %v1691 = vunpack.c.l.b16 %v1646
        %v1692 = vunpack.c.h.b16 %v1646
        %v1693 = vunpack.c.l.b16 %v1647
        %v1694 = vunpack.c.h.b16 %v1647
        %v1695 = vunpack.c.l.b16 %v1648
        %v1696 = vunpack.c.h.b16 %v1648
        %v1697 = vpack.c.b16 %v1665, %v1665
        %v1698 = vpack.c.b16 %v1666, %v1666
        %v1699 = vpack.c.b16 %v1667, %v1667
        %v1700 = vpack.c.b16 %v1668, %v1668
        %v1701 = vpack.c.b16 %v1669, %v1669
        %v1702 = vpack.c.b16 %v1670, %v1670
        %v1703 = vpack.c.b16 %v1671, %v1671
        %v1704 = vpack.c.b16 %v1672, %v1672
        %v1705 = vpack.c.b16 %v1673, %v1673
        %v1706 = vpack.c.b16 %v1674, %v1674
        %v1707 = vpack.c.b16 %v1675, %v1675
        %v1708 = vpack.c.b16 %v1676, %v1676
        %v1709 = vpack.c.b16 %v1677, %v1677
        %v1710 = vpack.c.b16 %v1678, %v1678
        %v1711 = vpack.c.b16 %v1679, %v1679
        %v1712 = vpack.c.b16 %v1680, %v1680
        %v1713 = vpack.c.b16 %v1681, %v1681
        %v1714 = vpack.c.b16 %v1682, %v1682
        %v1715 = vpack.c.b16 %v1683, %v1683
        %v1716 = vpack.c.b16 %v1684, %v1684
        %v1717 = vpack.c.b16 %v1685, %v1685
        %v1718 = vpack.c.b16 %v1686, %v1686
        %v1719 = vpack.c.b16 %v1687, %v1687
        %v1720 = vpack.c.b16 %v1688, %v1688
        %v1721 = vpack.c.b16 %v1689, %v1689
        %v1722 = vpack.c.b16 %v1690, %v1690
        %v1723 = vpack.c.b16 %v1691, %v1691
        %v1724 = vpack.c.b16 %v1692, %v1692
        %v1725 = vpack.c.b16 %v1693, %v1693
        %v1726 = vpack.c.b16 %v1694, %v1694
        %v1727 = vpack.c.b16 %v1695, %v1695
        %v1728 = vpack.c.b16 %v1696, %v1696
        %1761 = vst [vmem:[%s268] sm:$0xf] %v1697
        %1762 = vst [vmem:[%s268 + $0x4] sm:$0xf] %v1698
        %1763 = vst [vmem:[%s268 + $0x8] sm:$0xf] %v1699
        %1764 = vst [vmem:[%s268 + $0xc] sm:$0xf] %v1700
        %1765 = vst [vmem:[%s268 + $0x10] sm:$0xf] %v1701
        %1766 = vst [vmem:[%s268 + $0x14] sm:$0xf] %v1702
        %1767 = vst [vmem:[%s268 + $0x18] sm:$0xf] %v1703
        %1768 = vst [vmem:[%s268 + $0x1c] sm:$0xf] %v1704
        %1769 = vst [vmem:[%s268 + $0x20] sm:$0xf] %v1705
        %1770 = vst [vmem:[%s268 + $0x24] sm:$0xf] %v1706
        %1771 = vst [vmem:[%s268 + $0x28] sm:$0xf] %v1707
        %1772 = vst [vmem:[%s268 + $0x2c] sm:$0xf] %v1708
        %1773 = vst [vmem:[%s268 + $0x30] sm:$0xf] %v1709
        %1774 = vst [vmem:[%s268 + $0x34] sm:$0xf] %v1710
        %1775 = vst [vmem:[%s268 + $0x38] sm:$0xf] %v1711
        %1776 = vst [vmem:[%s268 + $0x3c] sm:$0xf] %v1712
        %1777 = vst [vmem:[%s268 + $0x40] sm:$0xf] %v1713
        %1778 = vst [vmem:[%s268 + $0x44] sm:$0xf] %v1714
        %1779 = vst [vmem:[%s268 + $0x48] sm:$0xf] %v1715
        %1780 = vst [vmem:[%s268 + $0x4c] sm:$0xf] %v1716
        %1781 = vst [vmem:[%s268 + $0x50] sm:$0xf] %v1717
        %1782 = vst [vmem:[%s268 + $0x54] sm:$0xf] %v1718
        %1783 = vst [vmem:[%s268 + $0x58] sm:$0xf] %v1719
        %1784 = vst [vmem:[%s268 + $0x5c] sm:$0xf] %v1720
        %1785 = vst [vmem:[%s268 + $0x60] sm:$0xf] %v1721
        %1786 = vst [vmem:[%s268 + $0x64] sm:$0xf] %v1722
        %1787 = vst [vmem:[%s268 + $0x68] sm:$0xf] %v1723
        %1788 = vst [vmem:[%s268 + $0x6c] sm:$0xf] %v1724
        %1789 = vst [vmem:[%s268 + $0x70] sm:$0xf] %v1725
        %1790 = vst [vmem:[%s268 + $0x74] sm:$0xf] %v1726
        %1791 = vst [vmem:[%s268 + $0x78] sm:$0xf] %v1727
        %1792 = vst [vmem:[%s268 + $0x7c] sm:$0xf] %v1728
        %v1809 = vunpack.c.l.b16 %v1060
        %v1810 = vunpack.c.l.b16 %v1061
        %v1811 = vunpack.c.l.b16 %v1062
        %v1812 = vunpack.c.l.b16 %v1063
        %v1813 = vunpack.c.l.b16 %v1064
        %v1814 = vunpack.c.l.b16 %v1065
        %v1815 = vunpack.c.l.b16 %v1066
        %v1816 = vunpack.c.l.b16 %v1067
        %v1817 = vunpack.c.l.b16 %v1068
        %v1818 = vunpack.c.l.b16 %v1069
        %v1819 = vunpack.c.l.b16 %v1070
        %v1820 = vunpack.c.l.b16 %v1071
        %v1821 = vunpack.c.l.b16 %v1072
        %v1822 = vunpack.c.l.b16 %v1073
        %v1823 = vunpack.c.l.b16 %v1074
        %v1824 = vunpack.c.l.b16 %v1075
        %v1825 = vpack.c.b16 %v1810, %v1809
        %v1826 = vpack.c.b16 %v1812, %v1811
        %v1827 = vpack.c.b16 %v1814, %v1813
        %v1828 = vpack.c.b16 %v1816, %v1815
        %v1829 = vpack.c.b16 %v1818, %v1817
        %v1830 = vpack.c.b16 %v1820, %v1819
        %v1831 = vpack.c.b16 %v1822, %v1821
        %v1832 = vpack.c.b16 %v1824, %v1823
        %1841 = vmatprep.subr.bf16.mxu0 0
        %1842 = vmatpush1.bf16.msra.mxu0 %v1832
        %1843 = vmatprep.subr.bf16.mxu0 0
        %1844 = vmatpush1.bf16.msra.mxu0 %v1831
        %1845 = vmatprep.subr.bf16.mxu0 0
        %1846 = vmatpush1.bf16.msra.mxu0 %v1830
        %1847 = vmatprep.subr.bf16.mxu0 0
        %1848 = vmatpush1.bf16.msra.mxu0 %v1829
        %1849 = vmatprep.subr.bf16.mxu0 0
        %1850 = vmatpush1.bf16.msra.mxu0 %v1828
        %1851 = vmatprep.subr.bf16.mxu0 0
        %1852 = vmatpush1.bf16.msra.mxu0 %v1827
        %1853 = vmatprep.subr.bf16.mxu0 0
        %1854 = vmatpush1.bf16.msra.mxu0 %v1826
        %1855 = vmatprep.subr.bf16.mxu0 0
        %1856 = vmatpush1.bf16.msra.mxu0 %v1825
        %1857 = vmatprep.subr.bf16.mxu0 0
        %1858 = vmatpush2.bf16.msra.mxu0 0
        %1859 = vmatprep.subr.bf16.mxu0 0
        %1860 = vmatpush2.bf16.msra.mxu0 0
        %1861 = vmatprep.subr.bf16.mxu0 0
        %1862 = vmatpush2.bf16.msra.mxu0 0
        %1863 = vmatprep.subr.bf16.mxu0 0
        %1864 = vmatpush2.bf16.msra.mxu0 0
        %1865 = vmatprep.subr.bf16.mxu0 0
        %1866 = vmatpush2.bf16.msra.mxu0 0
        %1867 = vmatprep.subr.bf16.mxu0 0
        %1868 = vmatpush2.bf16.msra.mxu0 0
        %1869 = vmatprep.subr.bf16.mxu0 0
        %1870 = vmatpush2.bf16.msra.mxu0 0
        %1871 = vmatprep.subr.bf16.mxu0 0
        %1872 = vmatpush2.bf16.msra.mxu0 0
        %1873 = vmatprep.mubr.bf16.mxu0 0
        %1874 = vmatmul.mubr.bf16.gmra.mxu0 %v1633
        %v1875 = vpop.f32.mrf.mxu0
        %v1876 = vadd.f32 0.0, %v1875
        %v1877 = vpop.f32.mrf.mxu0
        %v1878 = vpop.f32.mrf.mxu0
        %v1879 = vadd.f32 0.0, %v1878
        %v1880 = vpop.f32.mrf.mxu0
        %1881 = vmatprep.mubr.bf16.mxu0 0
        %1882 = vmatmul.mubr.bf16.gmra.mxu0 %v1634
        %v1883 = vpop.f32.mrf.mxu0
        %v1884 = vadd.f32 0.0, %v1883
        %v1885 = vpop.f32.mrf.mxu0
        %v1886 = vpop.f32.mrf.mxu0
        %v1887 = vadd.f32 0.0, %v1886
        %v1888 = vpop.f32.mrf.mxu0
        %1889 = vmatprep.mubr.bf16.mxu0 0
        %1890 = vmatmul.mubr.bf16.gmra.mxu0 %v1635
        %v1891 = vpop.f32.mrf.mxu0
        %v1892 = vadd.f32 0.0, %v1891
        %v1893 = vpop.f32.mrf.mxu0
        %v1894 = vpop.f32.mrf.mxu0
        %v1895 = vadd.f32 0.0, %v1894
        %v1896 = vpop.f32.mrf.mxu0
        %1897 = vmatprep.mubr.bf16.mxu0 0
        %1898 = vmatmul.mubr.bf16.gmra.mxu0 %v1636
        %v1899 = vpop.f32.mrf.mxu0
        %v1900 = vadd.f32 0.0, %v1899
        %v1901 = vpop.f32.mrf.mxu0
        %v1902 = vpop.f32.mrf.mxu0
        %v1903 = vadd.f32 0.0, %v1902
        %v1904 = vpop.f32.mrf.mxu0
        %1905 = vmatprep.mubr.bf16.mxu0 0
        %1906 = vmatmul.mubr.bf16.gmra.mxu0 %v1637
        %v1907 = vpop.f32.mrf.mxu0
        %v1908 = vadd.f32 0.0, %v1907
        %v1909 = vpop.f32.mrf.mxu0
        %v1910 = vpop.f32.mrf.mxu0
        %v1911 = vadd.f32 0.0, %v1910
        %v1912 = vpop.f32.mrf.mxu0
        %1913 = vmatprep.mubr.bf16.mxu0 0
        %1914 = vmatmul.mubr.bf16.gmra.mxu0 %v1638
        %v1915 = vpop.f32.mrf.mxu0
        %v1916 = vadd.f32 0.0, %v1915
        %v1917 = vpop.f32.mrf.mxu0
        %v1918 = vpop.f32.mrf.mxu0
        %v1919 = vadd.f32 0.0, %v1918
        %v1920 = vpop.f32.mrf.mxu0
        %1921 = vmatprep.mubr.bf16.mxu0 0
        %1922 = vmatmul.mubr.bf16.gmra.mxu0 %v1639
        %v1923 = vpop.f32.mrf.mxu0
        %v1924 = vadd.f32 0.0, %v1923
        %v1925 = vpop.f32.mrf.mxu0
        %v1926 = vpop.f32.mrf.mxu0
        %v1927 = vadd.f32 0.0, %v1926
        %v1928 = vpop.f32.mrf.mxu0
        %1929 = vmatprep.mubr.bf16.mxu0 0
        %1930 = vmatmul.mubr.bf16.gmra.mxu0 %v1640
        %v1931 = vpop.f32.mrf.mxu0
        %v1932 = vadd.f32 0.0, %v1931
        %v1933 = vpop.f32.mrf.mxu0
        %v1934 = vpop.f32.mrf.mxu0
        %v1935 = vadd.f32 0.0, %v1934
        %v1936 = vpop.f32.mrf.mxu0
        %1937 = vmatprep.mubr.bf16.mxu0 0
        %1938 = vmatmul.mubr.bf16.gmra.mxu0 %v1641
        %v1939 = vpop.f32.mrf.mxu0
        %v1940 = vadd.f32 0.0, %v1939
        %v1941 = vpop.f32.mrf.mxu0
        %v1942 = vpop.f32.mrf.mxu0
        %v1943 = vadd.f32 0.0, %v1942
        %v1944 = vpop.f32.mrf.mxu0
        %1945 = vmatprep.mubr.bf16.mxu0 0
        %1946 = vmatmul.mubr.bf16.gmra.mxu0 %v1642
        %v1947 = vpop.f32.mrf.mxu0
        %v1948 = vadd.f32 0.0, %v1947
        %v1949 = vpop.f32.mrf.mxu0
        %v1950 = vpop.f32.mrf.mxu0
        %v1951 = vadd.f32 0.0, %v1950
        %v1952 = vpop.f32.mrf.mxu0
        %1953 = vmatprep.mubr.bf16.mxu0 0
        %1954 = vmatmul.mubr.bf16.gmra.mxu0 %v1643
        %v1955 = vpop.f32.mrf.mxu0
        %v1956 = vadd.f32 0.0, %v1955
        %v1957 = vpop.f32.mrf.mxu0
        %v1958 = vpop.f32.mrf.mxu0
        %v1959 = vadd.f32 0.0, %v1958
        %v1960 = vpop.f32.mrf.mxu0
        %1961 = vmatprep.mubr.bf16.mxu0 0
        %1962 = vmatmul.mubr.bf16.gmra.mxu0 %v1644
        %v1963 = vpop.f32.mrf.mxu0
        %v1964 = vadd.f32 0.0, %v1963
        %v1965 = vpop.f32.mrf.mxu0
        %v1966 = vpop.f32.mrf.mxu0
        %v1967 = vadd.f32 0.0, %v1966
        %v1968 = vpop.f32.mrf.mxu0
        %1969 = vmatprep.mubr.bf16.mxu0 0
        %1970 = vmatmul.mubr.bf16.gmra.mxu0 %v1645
        %v1971 = vpop.f32.mrf.mxu0
        %v1972 = vadd.f32 0.0, %v1971
        %v1973 = vpop.f32.mrf.mxu0
        %v1974 = vpop.f32.mrf.mxu0
        %v1975 = vadd.f32 0.0, %v1974
        %v1976 = vpop.f32.mrf.mxu0
        %1977 = vmatprep.mubr.bf16.mxu0 0
        %1978 = vmatmul.mubr.bf16.gmra.mxu0 %v1646
        %v1979 = vpop.f32.mrf.mxu0
        %v1980 = vadd.f32 0.0, %v1979
        %v1981 = vpop.f32.mrf.mxu0
        %v1982 = vpop.f32.mrf.mxu0
        %v1983 = vadd.f32 0.0, %v1982
        %v1984 = vpop.f32.mrf.mxu0
        %1985 = vmatprep.mubr.bf16.mxu0 0
        %1986 = vmatmul.mubr.bf16.gmra.mxu0 %v1647
        %v1987 = vpop.f32.mrf.mxu0
        %v1988 = vadd.f32 0.0, %v1987
        %v1989 = vpop.f32.mrf.mxu0
        %v1990 = vpop.f32.mrf.mxu0
        %v1991 = vadd.f32 0.0, %v1990
        %v1992 = vpop.f32.mrf.mxu0
        %1993 = vmatprep.mubr.bf16.mxu0 0
        %1994 = vmatmul.mubr.bf16.gmra.mxu0 %v1648
        %v1995 = vpop.f32.mrf.mxu0
        %v1996 = vadd.f32 0.0, %v1995
        %v1997 = vpop.f32.mrf.mxu0
        %v1998 = vpop.f32.mrf.mxu0
        %v1999 = vadd.f32 0.0, %v1998
        %v2000 = vpop.f32.mrf.mxu0
        %2001 = vdwg.mxu0
        %v2002 = vld [vmem:[%s261] sm:$0xff]
        %v2003 = vld [vmem:[%s261 + $0x8] sm:$0xff]
        %v2004 = vld [vmem:[%s261 + $0x10] sm:$0xff]
        %v2005 = vld [vmem:[%s261 + $0x18] sm:$0xff]
        %v2006 = vld [vmem:[%s261 + $0x20] sm:$0xff]
        %v2007 = vld [vmem:[%s261 + $0x28] sm:$0xff]
        %v2008 = vld [vmem:[%s261 + $0x30] sm:$0xff]
        %v2009 = vld [vmem:[%s261 + $0x38] sm:$0xff]
        %v2010 = vld [vmem:[%s261 + $0x40] sm:$0xff]
        %v2011 = vld [vmem:[%s261 + $0x48] sm:$0xff]
        %v2012 = vld [vmem:[%s261 + $0x50] sm:$0xff]
        %v2013 = vld [vmem:[%s261 + $0x58] sm:$0xff]
        %v2014 = vld [vmem:[%s261 + $0x60] sm:$0xff]
        %v2015 = vld [vmem:[%s261 + $0x68] sm:$0xff]
        %v2016 = vld [vmem:[%s261 + $0x70] sm:$0xff]
        %v2017 = vld [vmem:[%s261 + $0x78] sm:$0xff]
        %v2018 = vld [vmem:[%s261 + $0x80] sm:$0xff]
        %v2019 = vld [vmem:[%s261 + $0x88] sm:$0xff]
        %v2020 = vld [vmem:[%s261 + $0x90] sm:$0xff]
        %v2021 = vld [vmem:[%s261 + $0x98] sm:$0xff]
        %v2022 = vld [vmem:[%s261 + $0xa0] sm:$0xff]
        %v2023 = vld [vmem:[%s261 + $0xa8] sm:$0xff]
        %v2024 = vld [vmem:[%s261 + $0xb0] sm:$0xff]
        %v2025 = vld [vmem:[%s261 + $0xb8] sm:$0xff]
        %v2026 = vld [vmem:[%s261 + $0xc0] sm:$0xff]
        %v2027 = vld [vmem:[%s261 + $0xc8] sm:$0xff]
        %v2028 = vld [vmem:[%s261 + $0xd0] sm:$0xff]
        %v2029 = vld [vmem:[%s261 + $0xd8] sm:$0xff]
        %v2030 = vld [vmem:[%s261 + $0xe0] sm:$0xff]
        %v2031 = vld [vmem:[%s261 + $0xe8] sm:$0xff]
        %v2032 = vld [vmem:[%s261 + $0xf0] sm:$0xff]
        %v2033 = vld [vmem:[%s261 + $0xf8] sm:$0xff]
        %v2034 = vadd.f32 %v2002, %v1876
        %v2035 = vadd.f32 %v2003, %v1879
        %v2036 = vadd.f32 %v2004, %v1884
        %v2037 = vadd.f32 %v2005, %v1887
        %v2038 = vadd.f32 %v2006, %v1892
        %v2039 = vadd.f32 %v2007, %v1895
        %v2040 = vadd.f32 %v2008, %v1900
        %v2041 = vadd.f32 %v2009, %v1903
        %v2042 = vadd.f32 %v2010, %v1908
        %v2043 = vadd.f32 %v2011, %v1911
        %v2044 = vadd.f32 %v2012, %v1916
        %v2045 = vadd.f32 %v2013, %v1919
        %v2046 = vadd.f32 %v2014, %v1924
        %v2047 = vadd.f32 %v2015, %v1927
        %v2048 = vadd.f32 %v2016, %v1932
        %v2049 = vadd.f32 %v2017, %v1935
        %v2050 = vadd.f32 %v2018, %v1940
        %v2051 = vadd.f32 %v2019, %v1943
        %v2052 = vadd.f32 %v2020, %v1948
        %v2053 = vadd.f32 %v2021, %v1951
        %v2054 = vadd.f32 %v2022, %v1956
        %v2055 = vadd.f32 %v2023, %v1959
        %v2056 = vadd.f32 %v2024, %v1964
        %v2057 = vadd.f32 %v2025, %v1967
        %v2058 = vadd.f32 %v2026, %v1972
        %v2059 = vadd.f32 %v2027, %v1975
        %v2060 = vadd.f32 %v2028, %v1980
        %v2061 = vadd.f32 %v2029, %v1983
        %v2062 = vadd.f32 %v2030, %v1988
        %v2063 = vadd.f32 %v2031, %v1991
        %v2064 = vadd.f32 %v2032, %v1996
        %v2065 = vadd.f32 %v2033, %v1999
        %vm2066 = vcmask 261120
        %2067 = vst.msk [vmem:[%s261] sm:$0xff] %vm2066, %v2034
        %2068 = vst.msk [vmem:[%s261 + $0x8] sm:$0xff] %vm2066, %v2035
        %2069 = vst.msk [vmem:[%s261 + $0x10] sm:$0xff] %vm2066, %v2036
        %2070 = vst.msk [vmem:[%s261 + $0x18] sm:$0xff] %vm2066, %v2037
        %2071 = vst.msk [vmem:[%s261 + $0x20] sm:$0xff] %vm2066, %v2038
        %2072 = vst.msk [vmem:[%s261 + $0x28] sm:$0xff] %vm2066, %v2039
        %2073 = vst.msk [vmem:[%s261 + $0x30] sm:$0xff] %vm2066, %v2040
        %2074 = vst.msk [vmem:[%s261 + $0x38] sm:$0xff] %vm2066, %v2041
        %2075 = vst.msk [vmem:[%s261 + $0x40] sm:$0xff] %vm2066, %v2042
        %2076 = vst.msk [vmem:[%s261 + $0x48] sm:$0xff] %vm2066, %v2043
        %2077 = vst.msk [vmem:[%s261 + $0x50] sm:$0xff] %vm2066, %v2044
        %2078 = vst.msk [vmem:[%s261 + $0x58] sm:$0xff] %vm2066, %v2045
        %2079 = vst.msk [vmem:[%s261 + $0x60] sm:$0xff] %vm2066, %v2046
        %2080 = vst.msk [vmem:[%s261 + $0x68] sm:$0xff] %vm2066, %v2047
        %2081 = vst.msk [vmem:[%s261 + $0x70] sm:$0xff] %vm2066, %v2048
        %2082 = vst.msk [vmem:[%s261 + $0x78] sm:$0xff] %vm2066, %v2049
        %2083 = vst.msk [vmem:[%s261 + $0x80] sm:$0xff] %vm2066, %v2050
        %2084 = vst.msk [vmem:[%s261 + $0x88] sm:$0xff] %vm2066, %v2051
        %2085 = vst.msk [vmem:[%s261 + $0x90] sm:$0xff] %vm2066, %v2052
        %2086 = vst.msk [vmem:[%s261 + $0x98] sm:$0xff] %vm2066, %v2053
        %2087 = vst.msk [vmem:[%s261 + $0xa0] sm:$0xff] %vm2066, %v2054
        %2088 = vst.msk [vmem:[%s261 + $0xa8] sm:$0xff] %vm2066, %v2055
        %2089 = vst.msk [vmem:[%s261 + $0xb0] sm:$0xff] %vm2066, %v2056
        %2090 = vst.msk [vmem:[%s261 + $0xb8] sm:$0xff] %vm2066, %v2057
        %2091 = vst.msk [vmem:[%s261 + $0xc0] sm:$0xff] %vm2066, %v2058
        %2092 = vst.msk [vmem:[%s261 + $0xc8] sm:$0xff] %vm2066, %v2059
        %2093 = vst.msk [vmem:[%s261 + $0xd0] sm:$0xff] %vm2066, %v2060
        %2094 = vst.msk [vmem:[%s261 + $0xd8] sm:$0xff] %vm2066, %v2061
        %2095 = vst.msk [vmem:[%s261 + $0xe0] sm:$0xff] %vm2066, %v2062
        %2096 = vst.msk [vmem:[%s261 + $0xe8] sm:$0xff] %vm2066, %v2063
        %2097 = vst.msk [vmem:[%s261 + $0xf0] sm:$0xff] %vm2066, %v2064
        %2098 = vst.msk [vmem:[%s261 + $0xf8] sm:$0xff] %vm2066, %v2065
        %p2099 = scmp.eq.s32.totalorder %s32, 1
        // Predicated region
        $region45: #{self_attn_pallas.1} parent=35 // pred_check
          %p2100 = pneg %p2099
        $region46: #{self_attn_pallas.1} parent=35 // pred_check_branch
          %2102 = sbr.rel (%p2100) target = $region48
        $region47: #{self_attn_pallas.1} parent=35 // pred_region
          %s2103 = sld [smem:[#allocation5]]
          %v2104 = vld [vmem:[%s261] sm:$0xff]
          %v2105 = vld [vmem:[%s261 + $0x8] sm:$0xff]
          %v2106 = vld [vmem:[%s261 + $0x10] sm:$0xff]
          %v2107 = vld [vmem:[%s261 + $0x18] sm:$0xff]
          %v2108 = vld [vmem:[%s261 + $0x20] sm:$0xff]
          %v2109 = vld [vmem:[%s261 + $0x28] sm:$0xff]
          %v2110 = vld [vmem:[%s261 + $0x30] sm:$0xff]
          %v2111 = vld [vmem:[%s261 + $0x38] sm:$0xff]
          %v2112 = vld [vmem:[%s261 + $0x40] sm:$0xff]
          %v2113 = vld [vmem:[%s261 + $0x48] sm:$0xff]
          %v2114 = vld [vmem:[%s261 + $0x50] sm:$0xff]
          %v2115 = vld [vmem:[%s261 + $0x58] sm:$0xff]
          %v2116 = vld [vmem:[%s261 + $0x60] sm:$0xff]
          %v2117 = vld [vmem:[%s261 + $0x68] sm:$0xff]
          %v2118 = vld [vmem:[%s261 + $0x70] sm:$0xff]
          %v2119 = vld [vmem:[%s261 + $0x78] sm:$0xff]
          %v2120 = vld [vmem:[%s261 + $0x80] sm:$0xff]
          %v2121 = vld [vmem:[%s261 + $0x88] sm:$0xff]
          %v2122 = vld [vmem:[%s261 + $0x90] sm:$0xff]
          %v2123 = vld [vmem:[%s261 + $0x98] sm:$0xff]
          %v2124 = vld [vmem:[%s261 + $0xa0] sm:$0xff]
          %v2125 = vld [vmem:[%s261 + $0xa8] sm:$0xff]
          %v2126 = vld [vmem:[%s261 + $0xb0] sm:$0xff]
          %v2127 = vld [vmem:[%s261 + $0xb8] sm:$0xff]
          %v2128 = vld [vmem:[%s261 + $0xc0] sm:$0xff]
          %v2129 = vld [vmem:[%s261 + $0xc8] sm:$0xff]
          %v2130 = vld [vmem:[%s261 + $0xd0] sm:$0xff]
          %v2131 = vld [vmem:[%s261 + $0xd8] sm:$0xff]
          %v2132 = vld [vmem:[%s261 + $0xe0] sm:$0xff]
          %v2133 = vld [vmem:[%s261 + $0xe8] sm:$0xff]
          %v2134 = vld [vmem:[%s261 + $0xf0] sm:$0xff]
          %v2135 = vld [vmem:[%s261 + $0xf8] sm:$0xff]
          %v2136 = vstv %s2103
          %v2137 = vmul.f32 %v2136, %v2104
          %v2138 = vmul.f32 %v2136, %v2105
          %v2139 = vmul.f32 %v2136, %v2106
          %v2140 = vmul.f32 %v2136, %v2107
          %v2141 = vmul.f32 %v2136, %v2108
          %v2142 = vmul.f32 %v2136, %v2109
          %v2143 = vmul.f32 %v2136, %v2110
          %v2144 = vmul.f32 %v2136, %v2111
          %v2145 = vmul.f32 %v2136, %v2112
          %v2146 = vmul.f32 %v2136, %v2113
          %v2147 = vmul.f32 %v2136, %v2114
          %v2148 = vmul.f32 %v2136, %v2115
          %v2149 = vmul.f32 %v2136, %v2116
          %v2150 = vmul.f32 %v2136, %v2117
          %v2151 = vmul.f32 %v2136, %v2118
          %v2152 = vmul.f32 %v2136, %v2119
          %v2153 = vmul.f32 %v2136, %v2120
          %v2154 = vmul.f32 %v2136, %v2121
          %v2155 = vmul.f32 %v2136, %v2122
          %v2156 = vmul.f32 %v2136, %v2123
          %v2157 = vmul.f32 %v2136, %v2124
          %v2158 = vmul.f32 %v2136, %v2125
          %v2159 = vmul.f32 %v2136, %v2126
          %v2160 = vmul.f32 %v2136, %v2127
          %v2161 = vmul.f32 %v2136, %v2128
          %v2162 = vmul.f32 %v2136, %v2129
          %v2163 = vmul.f32 %v2136, %v2130
          %v2164 = vmul.f32 %v2136, %v2131
          %v2165 = vmul.f32 %v2136, %v2132
          %v2166 = vmul.f32 %v2136, %v2133
          %v2167 = vmul.f32 %v2136, %v2134
          %v2168 = vmul.f32 %v2136, %v2135
          %v2169 = vld [vmem:[%s237] sm:$0xff]
          %v2170 = vld [vmem:[%s237 + $0x8] sm:$0xff]
          %v2171 = vld [vmem:[%s237 + $0x10] sm:$0xff]
          %v2172 = vld [vmem:[%s237 + $0x18] sm:$0xff]
          %v2173 = vld [vmem:[%s237 + $0x20] sm:$0xff]
          %v2174 = vld [vmem:[%s237 + $0x28] sm:$0xff]
          %v2175 = vld [vmem:[%s237 + $0x30] sm:$0xff]
          %v2176 = vld [vmem:[%s237 + $0x38] sm:$0xff]
          %v2177 = vld [vmem:[%s237 + $0x40] sm:$0xff]
          %v2178 = vld [vmem:[%s237 + $0x48] sm:$0xff]
          %v2179 = vld [vmem:[%s237 + $0x50] sm:$0xff]
          %v2180 = vld [vmem:[%s237 + $0x58] sm:$0xff]
          %v2181 = vld [vmem:[%s237 + $0x60] sm:$0xff]
          %v2182 = vld [vmem:[%s237 + $0x68] sm:$0xff]
          %v2183 = vld [vmem:[%s237 + $0x70] sm:$0xff]
          %v2184 = vld [vmem:[%s237 + $0x78] sm:$0xff]
          %v2185 = vld [vmem:[%s237 + $0x80] sm:$0xff]
          %v2186 = vld [vmem:[%s237 + $0x88] sm:$0xff]
          %v2187 = vld [vmem:[%s237 + $0x90] sm:$0xff]
          %v2188 = vld [vmem:[%s237 + $0x98] sm:$0xff]
          %v2189 = vld [vmem:[%s237 + $0xa0] sm:$0xff]
          %v2190 = vld [vmem:[%s237 + $0xa8] sm:$0xff]
          %v2191 = vld [vmem:[%s237 + $0xb0] sm:$0xff]
          %v2192 = vld [vmem:[%s237 + $0xb8] sm:$0xff]
          %v2193 = vld [vmem:[%s237 + $0xc0] sm:$0xff]
          %v2194 = vld [vmem:[%s237 + $0xc8] sm:$0xff]
          %v2195 = vld [vmem:[%s237 + $0xd0] sm:$0xff]
          %v2196 = vld [vmem:[%s237 + $0xd8] sm:$0xff]
          %v2197 = vld [vmem:[%s237 + $0xe0] sm:$0xff]
          %v2198 = vld [vmem:[%s237 + $0xe8] sm:$0xff]
          %v2199 = vld [vmem:[%s237 + $0xf0] sm:$0xff]
          %v2200 = vld [vmem:[%s237 + $0xf8] sm:$0xff]
          %v2201 = vadd.f32 %v2137, %v2169
          %v2202 = vadd.f32 %v2138, %v2170
          %v2203 = vadd.f32 %v2139, %v2171
          %v2204 = vadd.f32 %v2140, %v2172
          %v2205 = vadd.f32 %v2141, %v2173
          %v2206 = vadd.f32 %v2142, %v2174
          %v2207 = vadd.f32 %v2143, %v2175
          %v2208 = vadd.f32 %v2144, %v2176
          %v2209 = vadd.f32 %v2145, %v2177
          %v2210 = vadd.f32 %v2146, %v2178
          %v2211 = vadd.f32 %v2147, %v2179
          %v2212 = vadd.f32 %v2148, %v2180
          %v2213 = vadd.f32 %v2149, %v2181
          %v2214 = vadd.f32 %v2150, %v2182
          %v2215 = vadd.f32 %v2151, %v2183
          %v2216 = vadd.f32 %v2152, %v2184
          %v2217 = vadd.f32 %v2153, %v2185
          %v2218 = vadd.f32 %v2154, %v2186
          %v2219 = vadd.f32 %v2155, %v2187
          %v2220 = vadd.f32 %v2156, %v2188
          %v2221 = vadd.f32 %v2157, %v2189
          %v2222 = vadd.f32 %v2158, %v2190
          %v2223 = vadd.f32 %v2159, %v2191
          %v2224 = vadd.f32 %v2160, %v2192
          %v2225 = vadd.f32 %v2161, %v2193
          %v2226 = vadd.f32 %v2162, %v2194
          %v2227 = vadd.f32 %v2163, %v2195
          %v2228 = vadd.f32 %v2164, %v2196
          %v2229 = vadd.f32 %v2165, %v2197
          %v2230 = vadd.f32 %v2166, %v2198
          %v2231 = vadd.f32 %v2167, %v2199
          %v2232 = vadd.f32 %v2168, %v2200
          %2233 = vst.msk [vmem:[%s261] sm:$0xff] %vm2066, %v2201
          %2234 = vst.msk [vmem:[%s261 + $0x8] sm:$0xff] %vm2066, %v2202
          %2235 = vst.msk [vmem:[%s261 + $0x10] sm:$0xff] %vm2066, %v2203
          %2236 = vst.msk [vmem:[%s261 + $0x18] sm:$0xff] %vm2066, %v2204
          %2237 = vst.msk [vmem:[%s261 + $0x20] sm:$0xff] %vm2066, %v2205
          %2238 = vst.msk [vmem:[%s261 + $0x28] sm:$0xff] %vm2066, %v2206
          %2239 = vst.msk [vmem:[%s261 + $0x30] sm:$0xff] %vm2066, %v2207
          %2240 = vst.msk [vmem:[%s261 + $0x38] sm:$0xff] %vm2066, %v2208
          %2241 = vst.msk [vmem:[%s261 + $0x40] sm:$0xff] %vm2066, %v2209
          %2242 = vst.msk [vmem:[%s261 + $0x48] sm:$0xff] %vm2066, %v2210
          %2243 = vst.msk [vmem:[%s261 + $0x50] sm:$0xff] %vm2066, %v2211
          %2244 = vst.msk [vmem:[%s261 + $0x58] sm:$0xff] %vm2066, %v2212
          %2245 = vst.msk [vmem:[%s261 + $0x60] sm:$0xff] %vm2066, %v2213
          %2246 = vst.msk [vmem:[%s261 + $0x68] sm:$0xff] %vm2066, %v2214
          %2247 = vst.msk [vmem:[%s261 + $0x70] sm:$0xff] %vm2066, %v2215
          %2248 = vst.msk [vmem:[%s261 + $0x78] sm:$0xff] %vm2066, %v2216
          %2249 = vst.msk [vmem:[%s261 + $0x80] sm:$0xff] %vm2066, %v2217
          %2250 = vst.msk [vmem:[%s261 + $0x88] sm:$0xff] %vm2066, %v2218
          %2251 = vst.msk [vmem:[%s261 + $0x90] sm:$0xff] %vm2066, %v2219
          %2252 = vst.msk [vmem:[%s261 + $0x98] sm:$0xff] %vm2066, %v2220
          %2253 = vst.msk [vmem:[%s261 + $0xa0] sm:$0xff] %vm2066, %v2221
          %2254 = vst.msk [vmem:[%s261 + $0xa8] sm:$0xff] %vm2066, %v2222
          %2255 = vst.msk [vmem:[%s261 + $0xb0] sm:$0xff] %vm2066, %v2223
          %2256 = vst.msk [vmem:[%s261 + $0xb8] sm:$0xff] %vm2066, %v2224
          %2257 = vst.msk [vmem:[%s261 + $0xc0] sm:$0xff] %vm2066, %v2225
          %2258 = vst.msk [vmem:[%s261 + $0xc8] sm:$0xff] %vm2066, %v2226
          %2259 = vst.msk [vmem:[%s261 + $0xd0] sm:$0xff] %vm2066, %v2227
          %2260 = vst.msk [vmem:[%s261 + $0xd8] sm:$0xff] %vm2066, %v2228
          %2261 = vst.msk [vmem:[%s261 + $0xe0] sm:$0xff] %vm2066, %v2229
          %2262 = vst.msk [vmem:[%s261 + $0xe8] sm:$0xff] %vm2066, %v2230
          %2263 = vst.msk [vmem:[%s261 + $0xf0] sm:$0xff] %vm2066, %v2231
          %2264 = vst.msk [vmem:[%s261 + $0xf8] sm:$0xff] %vm2066, %v2232
        $region48: #{self_attn_pallas.1} parent=35 // pred_fallthru
          _
        %s2265 = sand.u32 %s136, 1
        %s2266 = scalar_lea.sflag [#allocation8], %s2265
        %s2267 = sand.u32 %s136, 1
        %s2268 = smul.addr %s2267, 256
        %s2269 = scalar_lea.vmem [#allocation9], %s2268
        %s2270 = sand.u32 %s164, 1
        %s2271 = scalar_lea.sflag [#allocation11], %s2270
        %s2272 = sand.u32 %s164, 1
        %s2273 = smul.addr %s2272, 128
        %s2274 = scalar_lea.vmem [#allocation10], %s2273
        // Predicated region
        $region49: #{self_attn_pallas.1} parent=35 // pred_check
          %p2275 = pneg %p146
        $region50: #{self_attn_pallas.1} parent=35 // pred_check_branch
          %2277 = sbr.rel (%p2275) target = $region52
        $region51: #{self_attn_pallas.1} parent=35 // pred_region
          %s2279 = ssub.s32 4096, 4096
          %2280 = vsyncadd %s2266, %s2279
          %s2281 = smul.addr %s31, 32
          %s2282 = smul.addr %s2281, 128
          %s2283 = scalar_lea.hbm %s4, %s2282
          %s2284 = sshll.u32 %s2269, 4
          %s2285 = int_to_ptr.vmem [resolvable:$true] %s2284
          %2290 = dma.vmem_to_hbm [thread:$0]  %s2285, 4096, %s2283, %s2266, 128, 128, 8
        $region52: #{self_attn_pallas.1} parent=35 // pred_fallthru
          _
        // Predicated region
        $region53: #{self_attn_pallas.1} parent=35 // pred_check
          %p2291 = pneg %p174
        $region54: #{self_attn_pallas.1} parent=35 // pred_check_branch
          %2293 = sbr.rel (%p2291) target = $region56
        $region55: #{self_attn_pallas.1} parent=35 // pred_region
          %s2295 = ssub.s32 2048, 2048
          %2296 = vsyncadd %s2271, %s2295
          %s2297 = smul.addr %s31, 64
          %s2298 = sadd.s32 %s32, %s2297
          %s2299 = smul.addr %s2298, 64
          %s2300 = scalar_lea.hbm %s5, %s2299
          %s2301 = sshll.u32 %s2274, 4
          %s2302 = int_to_ptr.vmem [resolvable:$true] %s2301
          %2307 = dma.vmem_to_hbm [thread:$0]  %s2302, 2048, %s2300, %s2271, 64, 128, 4
        $region56: #{self_attn_pallas.1} parent=35 // pred_fallthru
          _
      $region36: #{self_attn_pallas.1} parent=5 // pred_fallthru
        _
      %p2308 = scmp.le.s32.totalorder 2, %s22
      // Predicated region
      $region57: #{self_attn_pallas.1} parent=5 // pred_check
        %p2309 = pneg %p2308
      $region58: #{self_attn_pallas.1} parent=5 // pred_check_branch
        %2311 = sbr.rel (%p2309) target = $region60
      $region59: #{self_attn_pallas.1} parent=5 // pred_region
        %s2312 = ssub.s32 %s22, 2
        // Predicated region
        $region61: #{self_attn_pallas.1} parent=59 // pred_check
          %p2313 = pneg %p152
        $region62: #{self_attn_pallas.1} parent=59 // pred_check_branch
          %2315 = sbr.rel (%p2313) target = $region64
        $region63: #{self_attn_pallas.1} parent=59 // pred_region
          %s2316 = sand.u32 %s137, 1
          %s2317 = scalar_lea.sflag [#allocation8], %s2316
          %s2318 = sand.u32 %s137, 1
          %s2319 = smul.addr %s2318, 256
          %s2320 = scalar_lea.vmem [#allocation9], %s2319
          %2321 = dma.done %s2317, 4096
        $region64: #{self_attn_pallas.1} parent=59 // pred_fallthru
          _
        // Predicated region
        $region65: #{self_attn_pallas.1} parent=59 // pred_check
          %p2322 = pneg %p180
        $region66: #{self_attn_pallas.1} parent=59 // pred_check_branch
          %2324 = sbr.rel (%p2322) target = $region68
        $region67: #{self_attn_pallas.1} parent=59 // pred_region
          %s2325 = sand.u32 %s165, 1
          %s2326 = scalar_lea.sflag [#allocation11], %s2325
          %s2327 = sand.u32 %s165, 1
          %s2328 = smul.addr %s2327, 128
          %s2329 = scalar_lea.vmem [#allocation10], %s2328
          %2330 = dma.done %s2326, 2048
        $region68: #{self_attn_pallas.1} parent=59 // pred_fallthru
          _
      $region60: #{self_attn_pallas.1} parent=5 // pred_fallthru
        _
    $region6: #{self_attn_pallas.1} parent=1 // loop_footer
      %s26 = sadd.s32 1, %s22
    $region7: #{self_attn_pallas.1} parent=1 // loop_footer_branch
      %21 = sbr.rel target = $region3
    $region8: #{self_attn_pallas.1} parent=1 // loop_exit
      _
    %2331 = vsyncpa [#allocation7], 1
    %s2332 = scalar_lea.sflag [#allocation7], 1
    %2333 = vsyncpa %s2332, 1
    %2334 = vsyncpa [#allocation8], 1
    %s2335 = scalar_lea.sflag [#allocation8], 1
    %2336 = vsyncpa %s2335, 1
    %2337 = vsyncpa [#allocation11], 1
    %s2338 = scalar_lea.sflag [#allocation11], 1
    %2339 = vsyncpa %s2338, 1

</llo_original>
